<compile_context>
chip_gen: v6e
topology: v6e:2x2x1
jax: 0.10.0
libtpu: 0.0.40
codegen_flags: <defaults>
</compile_context>

<pallas_src>
import functools

import jax
import jax.numpy as jnp
from jax.experimental import pallas as pl
from jax.experimental.pallas import tpu as pltpu

_LANES = 128
_SUBLANES = 8


def _round_up(n, m):
    return ((n + m - 1) // m) * m


def _disc_sc_kernel(x_ref, w_ref, b_ref, o_ref, *, pack, d):
    # x_ref: (tile_rows, pack*d = 128) VMEM   `pack` samples per packed row
    # w_ref: (1, pack*d)               VMEM   weight row tiled `pack` times (resident)
    # b_ref: (1,)                      SMEM   bias scalar
    # o_ref: (tile_rows, pack)         VMEM   one output per packed sample
    x = x_ref[...].astype(jnp.float32)           # f32 accumulation even for bf16 in
    w = w_ref[...].astype(jnp.float32)           # (1, 128) broadcasts over rows
    b = b_ref[0]
    p = x * w                                    # VPU, fully lane-dense
    # Segmented d-lane reduce: sample j of each packed row lives in lanes
    # [j*d, (j+1)*d).  Static lane slices + XLU lane-reduce, pure f32.
    segs = []
    for j in range(pack):
        segs.append(jnp.sum(p[:, j * d:(j + 1) * d], axis=1, keepdims=True))
    seg = jnp.concatenate(segs, axis=1) if pack > 1 else segs[0]
    o_ref[...] = (seg + b).astype(o_ref.dtype)


def discriminator_sc_forward(x, w_row, b, *, samples_per_tile=16384,
                             min_pallas_rows=1024):
    """Linear(D -> 1) forward:  (N, D) -> (N, 1)  ==  x @ w_row.T + b.

    x:     (N, D) float32
    w_row: (1, D) float32   (nn.Linear weight layout: (out=1, in=D))
    b:     (1,)   float32
    """
    N, D = x.shape
    out_dtype = x.dtype

    # Fast path: tiny batches (and feature dims that don't pack into 128 lanes)
    # are strictly faster as a plain fused XLA matvec than as a custom call.
    if N < min_pallas_rows or _LANES % D != 0 or D < _SUBLANES:
        # TODO(synk): D not dividing 128 also falls back to XLA here.
        return (jnp.dot(x, w_row.T, precision=jax.lax.Precision.HIGHEST)
                + b).astype(out_dtype)

    pack = _LANES // D                           # samples per 128-lane packed row
    n_pad = _round_up(N, pack)
    if n_pad != N:
        x = jnp.pad(x, ((0, n_pad - N), (0, 0)))
    rows = n_pad // pack
    xp = x.reshape(rows, pack * D)               # free row-major view, lane-dense
    w_tiled = jnp.tile(w_row, (1, pack))         # (1, 128), VMEM-resident in kernel

    # ~samples_per_tile samples per grid step, but force >= 2 grid steps when
    # possible so the "parallel" axis can split across both v7x TensorCores.
    tile_rows = min(max(samples_per_tile // pack, _SUBLANES),
                    _round_up(pl.cdiv(rows, 2), _SUBLANES))
    if tile_rows >= rows:
        tile_rows = rows                         # single full-extent block
    grid = (pl.cdiv(rows, tile_rows),)

    kernel = functools.partial(_disc_sc_kernel, pack=pack, d=D)
    out_packed = pl.pallas_call(
        kernel,
        out_shape=jax.ShapeDtypeStruct((rows, pack), out_dtype),
        grid=grid,
        in_specs=[
            # Packed x rows: streamed, double-buffered, fully lane-dense DMA.
            pl.BlockSpec((tile_rows, pack * D), lambda i: (i, 0)),
            # Tiled weight row: constant index_map -> stays VMEM-resident.
            pl.BlockSpec((1, pack * D), lambda i: (0, 0)),
            # Bias: whole (1,) array in SMEM, read on the scalar path.
            pl.BlockSpec(memory_space=pltpu.MemorySpace.SMEM),
        ],
        out_specs=pl.BlockSpec((tile_rows, pack), lambda i: (i, 0)),
        compiler_params=pltpu.CompilerParams(
            dimension_semantics=("parallel",),
            vmem_limit_bytes=32 * 1024 * 1024,
        ),
        cost_estimate=pl.CostEstimate(
            flops=2 * n_pad * D,
            bytes_accessed=4 * (n_pad * D + pack * D + 1 + n_pad),
            transcendentals=0,
        ),
    )(xp, w_tiled, b)

    out = out_packed.reshape(n_pad, 1)           # free view back to sample-major
    if n_pad != N:
        out = out[:N]
    return out


if __name__ == "__main__":
    cell_type_dim = 32

    key = jax.random.PRNGKey(0)
    kx, kw, kb, kx2 = jax.random.split(key, 4)

    # nn.Linear(cell_type_dim, 1): weight (1, cell_type_dim), bias (1,)
    weight = jax.random.normal(kw, (1, cell_type_dim), dtype=jnp.float32) * 0.1
    bias = jax.random.normal(kb, (1,), dtype=jnp.float32) * 0.1

    def reference(xv):
        # Pure-f32 VPU reference (avoids MXU default-precision ambiguity).
        return jnp.sum(xv * weight, axis=1, keepdims=True) + bias

    # 1) Shipped tiny shape (batch=8): takes the XLA fast path.
    x_small = jax.random.normal(kx, (8, cell_type_dim), dtype=jnp.float32)
    out_small = jax.block_until_ready(discriminator_sc_forward(x_small, weight, bias))
    assert out_small.shape == (8, 1)
    assert jnp.allclose(out_small, reference(x_small), atol=1e-5, rtol=1e-5)

    # 2) Larger (still small) batch that exercises the Pallas kernel:
    #    lane-packing, pad-to-multiple-of-pack, a 2-step grid and a masked
    #    partial last tile.
    n_big = 4101
    x_big = jax.random.normal(kx2, (n_big, cell_type_dim), dtype=jnp.float32)
    out_big = jax.block_until_ready(discriminator_sc_forward(x_big, weight, bias))
    assert out_big.shape == (n_big, 1)
    assert jnp.allclose(out_big, reference(x_big), atol=1e-5, rtol=1e-5)

    print("KERNEL_OK")
</pallas_src>

<mosaic_0001>
module attributes {stable_mosaic.version = 11 : i64} {
  func.func @_disc_sc_kernel(%arg0: i32, %arg1: memref<520x128xf32, #tpu.memory_space<vmem>>, %arg2: memref<1x128xf32, #tpu.memory_space<vmem>>, %arg3: memref<1xf32, #tpu.memory_space<smem>>, %arg4: memref<520x4xf32, #tpu.memory_space<vmem>>) attributes {dimension_semantics = [#tpu.dimension_semantics<parallel>], iteration_bounds = array<i64: 2>, scalar_prefetch = 0 : i64, scratch_operands = 0 : i64, tpu.core_type = #tpu.core_type<tc>, window_params = [{transform_indices = @transform_0, window_bounds = array<i64: 520, 128>}, {pipeline_mode = #tpu.pipeline_mode<synchronous>, transform_indices = @transform_1, window_bounds = array<i64: 1, 128>}, {transform_indices = @transform_2, window_bounds = array<i64: 1>}, {transform_indices = @transform_3, window_bounds = array<i64: 520, 4>}]} {
    %c0 = arith.constant 0 : index
    %c0_0 = arith.constant 0 : index
    %0 = vector.load %arg1[%c0, %c0_0] : memref<520x128xf32, #tpu.memory_space<vmem>>, vector<520x128xf32>
    %c0_1 = arith.constant 0 : index
    %c0_2 = arith.constant 0 : index
    %1 = vector.load %arg2[%c0_1, %c0_2] : memref<1x128xf32, #tpu.memory_space<vmem>>, vector<1x128xf32>
    %c0_3 = arith.constant 0 : index
    %2 = memref.load %arg3[%c0_3] : memref<1xf32, #tpu.memory_space<smem>>
    %3 = vector.broadcast %1 : vector<1x128xf32> to vector<520x128xf32>
    %4 = arith.mulf %0, %3 : vector<520x128xf32>
    %5 = vector.extract_strided_slice %4 {offsets = [0, 0], sizes = [520, 32], strides = [1, 1]} : vector<520x128xf32> to vector<520x32xf32>
    %cst = arith.constant dense<0.000000e+00> : vector<520xf32>
    %6 = vector.multi_reduction <add>, %5, %cst [1] : vector<520x32xf32> to vector<520xf32>
    %7 = vector.shape_cast %6 : vector<520xf32> to vector<520x1xf32>
    %8 = vector.extract_strided_slice %4 {offsets = [0, 32], sizes = [520, 32], strides = [1, 1]} : vector<520x128xf32> to vector<520x32xf32>
    %cst_4 = arith.constant dense<0.000000e+00> : vector<520xf32>
    %9 = vector.multi_reduction <add>, %8, %cst_4 [1] : vector<520x32xf32> to vector<520xf32>
    %10 = vector.shape_cast %9 : vector<520xf32> to vector<520x1xf32>
    %11 = vector.extract_strided_slice %4 {offsets = [0, 64], sizes = [520, 32], strides = [1, 1]} : vector<520x128xf32> to vector<520x32xf32>
    %cst_5 = arith.constant dense<0.000000e+00> : vector<520xf32>
    %12 = vector.multi_reduction <add>, %11, %cst_5 [1] : vector<520x32xf32> to vector<520xf32>
    %13 = vector.shape_cast %12 : vector<520xf32> to vector<520x1xf32>
    %14 = vector.extract_strided_slice %4 {offsets = [0, 96], sizes = [520, 32], strides = [1, 1]} : vector<520x128xf32> to vector<520x32xf32>
    %cst_6 = arith.constant dense<0.000000e+00> : vector<520xf32>
    %15 = vector.multi_reduction <add>, %14, %cst_6 [1] : vector<520x32xf32> to vector<520xf32>
    %16 = vector.shape_cast %15 : vector<520xf32> to vector<520x1xf32>
    %17 = tpu.concatenate %7, %10, %13, %16 in 1 : vector<520x1xf32>, vector<520x1xf32>, vector<520x1xf32>, vector<520x1xf32> -> vector<520x4xf32>
    %18 = vector.broadcast %2 : f32 to vector<520x4xf32>
    %19 = arith.addf %17, %18 : vector<520x4xf32>
    %c0_7 = arith.constant 0 : index
    %c0_8 = arith.constant 0 : index
    %20 = vector.load %arg4[%c0_7, %c0_8] : memref<520x4xf32, #tpu.memory_space<vmem>>, vector<520x4xf32>
    tpu.vector_store %arg4[%c0_7, %c0_8], %19 {strides = array<i32>} : memref<520x4xf32, #tpu.memory_space<vmem>>, vector<520x4xf32>,
    return
  }
  func.func @transform_0(%arg0: i32) -> (i32, i32) {
    %c0_i32 = arith.constant 0 : i32
    %c0_i32_0 = arith.constant 0 : i32
    return %arg0, %c0_i32 : i32, i32
  }
  func.func @transform_1(%arg0: i32) -> (i32, i32) {
    %c0_i32 = arith.constant 0 : i32
    %c0_i32_0 = arith.constant 0 : i32
    %c0_i32_1 = arith.constant 0 : i32
    return %c0_i32, %c0_i32_0 : i32, i32
  }
  func.func @transform_2(%arg0: i32) -> i32 {
    %c0_i32 = arith.constant 0 : i32
    %c0_i32_0 = arith.constant 0 : i32
    return %c0_i32 : i32
  }
  func.func @transform_3(%arg0: i32) -> (i32, i32) {
    %c0_i32 = arith.constant 0 : i32
    %c0_i32_0 = arith.constant 0 : i32
    return %arg0, %c0_i32 : i32, i32
  }
}

</mosaic_0001>

<llo_original>
// kernel: tpu_custom_call.1
$region0: #{tpu_custom_call.1}
  #allocation0 [shape = 'u32[]', space=smem, size = 0x4, offset = 0x4, fixed_abs, tag = 'smem constant byte address 0x4 - core index']
  #allocation1 [shape = 'u32[144,128]{1,0:T(1,128)}', space=vmem, size = 0x12000, scoped, tag = 'internal scratch']
  #allocation2 [shape = 'f32[1]{0:T(128)S(6)}', space=smem, size = 0x200, scoped, tag = 'scoped memory for tpu_custom_call.1']
  %s0 = inlined_call_operand.hbm [shape: f32[1026,128], index: 0, kind: input, shape index: {}]
  %s1 = inlined_call_operand.vmem [shape: f32[1,128], index: 1, kind: input, shape index: {}]
  %s2 = inlined_call_operand.<no memory space> [shape: f32[1], index: 2, kind: input, shape index: {}]
  %s3 = inlined_call_operand.vmem [shape: f32[1026,4], index: 3, kind: output, shape index: {}]
  %s4 = sld [smem:[#allocation0]]
  $region97: #{tpu_custom_call.1} parent=0
    _
  %s6 = ssub.s32 1, %s4
  %s7 = scalar_select 0, %s6, %s4
  %8 = sst [smem:[#allocation2]] %s2
  $region1: #{tpu_custom_call.1} parent=0
    #allocation3 [shape = 'u8[532480]{0}', space=vmem, size = 0x82000, scoped, tag = 'input window, operand 0']
    #allocation4 [shape = 's32[2]{0}', space=sflag, size = 0x8, scoped, tag = 'scoped memory for tpu_custom_call.1']
    #allocation5 [shape = 'u8[532480]{0}', space=vmem, size = 0x82000, scoped, tag = 'output window, operand 0']
    %9 = vsyncpa [#allocation4], 0
    %s10 = scalar_lea.sflag [#allocation4], 1
    %11 = vsyncpa %s10, 0
    loop: start=0, step=1, limit=4
    $region2: #{tpu_custom_call.1} parent=1 // loop_pre_header
      _
    $region3: #{tpu_custom_call.1} parent=1 // loop_header
      %s13 = sphi 0, %s17
      %p14 = scmp.ge.s32.totalorder %s13, 4
      %s23 = sphi 0, %s25
      %s26 = sphi 0, %s23
      %s27 = sphi 0, %s26
      %s43 = sphi 0, %s27
      %s47 = sphi 0, %s47
      %s49 = sphi 0, %s47
      %s50 = sphi 0, %s49
      %s64 = sphi 0, %s50
      %s68 = sphi 0, %s68
      %s70 = sphi 0, %s68
      %s71 = sphi 0, %s70
      %s85 = sphi 0, %s71
      %s91 = sphi 0, %s93
      %s94 = sphi 0, %s91
      %s95 = sphi 0, %s94
      %s111 = sphi 0, %s95
    $region4: #{tpu_custom_call.1} parent=1 // loop_header_branch
      %16 = sbr.rel (%p14) target = $region8
    $region5: #{tpu_custom_call.1} parent=1 // loop_body
      %s18 = ssub.s32 %s13, 1
      %s19 = ssub.s32 %s13, 2
      %s20 = sadd.s32 %s13, 1
      %s21 = ssub.s32 %s13, %s20
      %p22 = scmp.eq.s32.totalorder %s21, 0
      %s24 = sadd.s32 %s23, 1
      %s25 = scalar_select %p22, %s23, %s24
      %p28 = pneg %p22
      %p29 = scmp.eq.s32.totalorder %s13, 1
      %p30 = por %p28, %p29
      %p31 = scmp.ne.s32.totalorder %s23, %s26
      %p32 = scmp.eq.s32.totalorder %s13, 0
      %p33 = por %p31, %p32
      %p34 = scmp.ne.s32.totalorder %s23, %s26
      %p35 = scmp.eq.s32.totalorder %s18, 1
      %p36 = por %p34, %p35
      %p37 = scmp.ne.s32.totalorder %s26, %s27
      %p38 = scmp.eq.s32.totalorder %s18, 0
      %p39 = por %p37, %p38
      %p40 = scmp.ne.s32.totalorder %s26, %s27
      %p41 = scmp.eq.s32.totalorder %s19, 1
      %p42 = por %p40, %p41
      %p44 = scmp.ne.s32.totalorder %s27, %s43
      %p45 = scmp.eq.s32.totalorder %s19, 0
      %p46 = por %p44, %p45
      %s48 = sadd.s32 %s47, 1
      %p51 = scmp.eq.s32.totalorder %s13, 1
      %p52 = scmp.ne.s32.totalorder %s47, %s49
      %p53 = scmp.eq.s32.totalorder %s13, 0
      %p54 = por %p52, %p53
      %p55 = scmp.ne.s32.totalorder %s47, %s49
      %p56 = scmp.eq.s32.totalorder %s18, 1
      %p57 = por %p55, %p56
      %p58 = scmp.ne.s32.totalorder %s49, %s50
      %p59 = scmp.eq.s32.totalorder %s18, 0
      %p60 = por %p58, %p59
      %p61 = scmp.ne.s32.totalorder %s49, %s50
      %p62 = scmp.eq.s32.totalorder %s19, 1
      %p63 = por %p61, %p62
      %p65 = scmp.ne.s32.totalorder %s50, %s64
      %p66 = scmp.eq.s32.totalorder %s19, 0
      %p67 = por %p65, %p66
      %s69 = sadd.s32 %s68, 1
      %p72 = scmp.eq.s32.totalorder %s13, 1
      %p73 = scmp.ne.s32.totalorder %s68, %s70
      %p74 = scmp.eq.s32.totalorder %s13, 0
      %p75 = por %p73, %p74
      %p76 = scmp.ne.s32.totalorder %s68, %s70
      %p77 = scmp.eq.s32.totalorder %s18, 1
      %p78 = por %p76, %p77
      %p79 = scmp.ne.s32.totalorder %s70, %s71
      %p80 = scmp.eq.s32.totalorder %s18, 0
      %p81 = por %p79, %p80
      %p82 = scmp.ne.s32.totalorder %s70, %s71
      %p83 = scmp.eq.s32.totalorder %s19, 1
      %p84 = por %p82, %p83
      %p86 = scmp.ne.s32.totalorder %s71, %s85
      %p87 = scmp.eq.s32.totalorder %s19, 0
      %p88 = por %p86, %p87
      %s89 = ssub.s32 %s13, %s20
      %p90 = scmp.eq.s32.totalorder %s89, 0
      %s92 = sadd.s32 %s91, 1
      %s93 = scalar_select %p90, %s91, %s92
      %p96 = pneg %p90
      %p97 = scmp.eq.s32.totalorder %s13, 1
      %p98 = por %p96, %p97
      %p99 = scmp.ne.s32.totalorder %s91, %s94
      %p100 = scmp.eq.s32.totalorder %s13, 0
      %p101 = por %p99, %p100
      %p102 = scmp.ne.s32.totalorder %s91, %s94
      %p103 = scmp.eq.s32.totalorder %s18, 1
      %p104 = por %p102, %p103
      %p105 = scmp.ne.s32.totalorder %s94, %s95
      %p106 = scmp.eq.s32.totalorder %s18, 0
      %p107 = por %p105, %p106
      %p108 = scmp.ne.s32.totalorder %s94, %s95
      %p109 = scmp.eq.s32.totalorder %s19, 1
      %p110 = por %p108, %p109
      %p112 = scmp.ne.s32.totalorder %s95, %s111
      %p113 = scmp.eq.s32.totalorder %s19, 0
      %p114 = por %p112, %p113
      %p115 = scmp.le.s32.totalorder 1, %s13
      %p116 = scmp.lt.s32.totalorder %s13, 3
      %p117 = pnand %p115, %p116
      %p118 = pneg %p117
      // Predicated region
      $region9: #{tpu_custom_call.1} parent=5 // pred_check
        _
      $region10: #{tpu_custom_call.1} parent=5 // pred_check_branch
        %120 = sbr.rel (%p117) target = $region12
      $region11: #{tpu_custom_call.1} parent=5 // pred_region
        %s121 = ssub.s32 %s13, 1
        // Predicated region
        $region13: #{tpu_custom_call.1} parent=11 // pred_check
          %p122 = pneg %p60
        $region14: #{tpu_custom_call.1} parent=11 // pred_check_branch
          %124 = sbr.rel (%p122) target = $region16
        $region15: #{tpu_custom_call.1} parent=11 // pred_region
          _
        $region16: #{tpu_custom_call.1} parent=11 // pred_fallthru
          _
        // Predicated region
        $region17: #{tpu_custom_call.1} parent=11 // pred_check
          %p125 = pneg %p81
        $region18: #{tpu_custom_call.1} parent=11 // pred_check_branch
          %127 = sbr.rel (%p125) target = $region20
        $region19: #{tpu_custom_call.1} parent=11 // pred_region
          _
        $region20: #{tpu_custom_call.1} parent=11 // pred_fallthru
          _
      $region12: #{tpu_custom_call.1} parent=5 // pred_fallthru
        _
      %p128 = scmp.lt.s32.totalorder %s13, 2
      // Predicated region
      $region21: #{tpu_custom_call.1} parent=5 // pred_check
        %p129 = pneg %p128
      $region22: #{tpu_custom_call.1} parent=5 // pred_check_branch
        %131 = sbr.rel (%p129) target = $region24
      $region23: #{tpu_custom_call.1} parent=5 // pred_region
        // Predicated region
        $region25: #{tpu_custom_call.1} parent=23 // pred_check
          %p132 = pneg %p33
        $region26: #{tpu_custom_call.1} parent=23 // pred_check_branch
          %134 = sbr.rel (%p132) target = $region28
        $region27: #{tpu_custom_call.1} parent=23 // pred_region
          %s135 = sand.u32 %s23, 1
          %s136 = scalar_lea.sflag [#allocation4], %s135
          %s137 = sand.u32 %s23, 1
          %s138 = smul.addr %s137, 520
          %s139 = scalar_lea.vmem [#allocation3], %s138
          %s140 = smul.u32 65, %s13
          %s141 = ssub.s32 129, %s140
          %p142 = scmp.lt.s32.totalorder %s141, 65
          %s143 = scalar_select %p142, %s141, 65
          %s144 = smul.u32 128, %s143
          %s146 = ssub.s32 8320, %s144
          %147 = vsyncadd %s136, %s146
          %p148 = scmp.ne.s32.totalorder 0, %s144
          %s149 = smul.addr %s140, 128
          %s150 = scalar_lea.hbm %s0, %s149
          %s151 = smul.u32 8, %s143
          %s152 = sshll.u32 %s139, 4
          %s153 = int_to_ptr.vmem [resolvable:$true] %s152
          %s154 = sshll.u32 %s151, 4
          %158 = dma.hbm_to_vmem [thread:$0]  (%p148), %s150, %s154, %s153, %s136, 128, 128, 8
        $region28: #{tpu_custom_call.1} parent=23 // pred_fallthru
          _
      $region24: #{tpu_custom_call.1} parent=5 // pred_fallthru
        _
      %p159 = scmp.le.s32.totalorder 1, %s13
      %p160 = scmp.lt.s32.totalorder %s13, 3
      %p161 = pnand %p159, %p160
      %p162 = pneg %p161
      // Predicated region
      $region29: #{tpu_custom_call.1} parent=5 // pred_check
        _
      $region30: #{tpu_custom_call.1} parent=5 // pred_check_branch
        %164 = sbr.rel (%p161) target = $region32
      $region31: #{tpu_custom_call.1} parent=5 // pred_region
        %s165 = ssub.s32 %s13, 1
        %s166 = sand.u32 %s26, 1
        %s167 = scalar_lea.sflag [#allocation4], %s166
        %s168 = sand.u32 %s26, 1
        %s169 = smul.addr %s168, 520
        %s170 = scalar_lea.vmem [#allocation3], %s169
        // Predicated region
        $region33: #{tpu_custom_call.1} parent=31 // pred_check
          %p171 = pneg %p39
        $region34: #{tpu_custom_call.1} parent=31 // pred_check_branch
          %173 = sbr.rel (%p171) target = $region36
        $region35: #{tpu_custom_call.1} parent=31 // pred_region
          %174 = dma.done %s167, 8320
        $region36: #{tpu_custom_call.1} parent=31 // pred_fallthru
          _
        %s175 = sand.u32 %s26, 1
        %s176 = scalar_lea.sflag [#allocation4], %s175
        %s177 = sand.u32 %s26, 1
        %s178 = smul.addr %s177, 520
        %s179 = scalar_lea.vmem [#allocation3], %s178
        %p180 = pneg %p39
        %p181 = pneg %p36
        %p182 = pneg %p60
        %p183 = pneg %p57
        %p184 = pneg %p81
        %p185 = pneg %p78
        %p186 = pneg %p107
        %p187 = pneg %p104
        %s188 = sand.u32 %s94, 1
        %s189 = sand.u32 %s94, 1
        %s190 = smul.addr %s189, 520
        %s191 = scalar_lea.vmem [#allocation5], %s190
        %s192 = smul.u32 65, %s18
        %s193 = ssub.s32 129, %s192
        %p194 = scmp.lt.s32.totalorder %s193, 65
        %s195 = scalar_select %p194, %s193, 65
        %s196 = smul.u32 128, %s195
        %s197 = smul.u32 65, %s18
        %s198 = ssub.s32 129, %s197
        %p199 = scmp.lt.s32.totalorder %s198, 65
        %s200 = scalar_select %p199, %s198, 65
        %s201 = smul.u32 128, %s200
        %v202 = vld [vmem:[%s170] sm:$0xff]
        %v203 = vld [vmem:[%s170 + $0x8] sm:$0xff]
        %v204 = vld [vmem:[%s170 + $0x10] sm:$0xff]
        %v205 = vld [vmem:[%s170 + $0x18] sm:$0xff]
        %v206 = vld [vmem:[%s170 + $0x20] sm:$0xff]
        %v207 = vld [vmem:[%s170 + $0x28] sm:$0xff]
        %v208 = vld [vmem:[%s170 + $0x30] sm:$0xff]
        %v209 = vld [vmem:[%s170 + $0x38] sm:$0xff]
        %v210 = vld [vmem:[%s170 + $0x40] sm:$0xff]
        %v211 = vld [vmem:[%s170 + $0x48] sm:$0xff]
        %v212 = vld [vmem:[%s170 + $0x50] sm:$0xff]
        %v213 = vld [vmem:[%s170 + $0x58] sm:$0xff]
        %v214 = vld [vmem:[%s170 + $0x60] sm:$0xff]
        %v215 = vld [vmem:[%s170 + $0x68] sm:$0xff]
        %v216 = vld [vmem:[%s170 + $0x70] sm:$0xff]
        %v217 = vld [vmem:[%s170 + $0x78] sm:$0xff]
        %v218 = vld [vmem:[%s170 + $0x80] sm:$0xff]
        %v219 = vld [vmem:[%s170 + $0x88] sm:$0xff]
        %v220 = vld [vmem:[%s170 + $0x90] sm:$0xff]
        %v221 = vld [vmem:[%s170 + $0x98] sm:$0xff]
        %v222 = vld [vmem:[%s170 + $0xa0] sm:$0xff]
        %v223 = vld [vmem:[%s170 + $0xa8] sm:$0xff]
        %v224 = vld [vmem:[%s170 + $0xb0] sm:$0xff]
        %v225 = vld [vmem:[%s170 + $0xb8] sm:$0xff]
        %v226 = vld [vmem:[%s170 + $0xc0] sm:$0xff]
        %v227 = vld [vmem:[%s170 + $0xc8] sm:$0xff]
        %v228 = vld [vmem:[%s170 + $0xd0] sm:$0xff]
        %v229 = vld [vmem:[%s170 + $0xd8] sm:$0xff]
        %v230 = vld [vmem:[%s170 + $0xe0] sm:$0xff]
        %v231 = vld [vmem:[%s170 + $0xe8] sm:$0xff]
        %v232 = vld [vmem:[%s170 + $0xf0] sm:$0xff]
        %v233 = vld [vmem:[%s170 + $0xf8] sm:$0xff]
        %v234 = vld [vmem:[%s170 + $0x100] sm:$0xff]
        %v235 = vld [vmem:[%s170 + $0x108] sm:$0xff]
        %v236 = vld [vmem:[%s170 + $0x110] sm:$0xff]
        %v237 = vld [vmem:[%s170 + $0x118] sm:$0xff]
        %v238 = vld [vmem:[%s170 + $0x120] sm:$0xff]
        %v239 = vld [vmem:[%s170 + $0x128] sm:$0xff]
        %v240 = vld [vmem:[%s170 + $0x130] sm:$0xff]
        %v241 = vld [vmem:[%s170 + $0x138] sm:$0xff]
        %v242 = vld [vmem:[%s170 + $0x140] sm:$0xff]
        %v243 = vld [vmem:[%s170 + $0x148] sm:$0xff]
        %v244 = vld [vmem:[%s170 + $0x150] sm:$0xff]
        %v245 = vld [vmem:[%s170 + $0x158] sm:$0xff]
        %v246 = vld [vmem:[%s170 + $0x160] sm:$0xff]
        %v247 = vld [vmem:[%s170 + $0x168] sm:$0xff]
        %v248 = vld [vmem:[%s170 + $0x170] sm:$0xff]
        %v249 = vld [vmem:[%s170 + $0x178] sm:$0xff]
        %v250 = vld [vmem:[%s170 + $0x180] sm:$0xff]
        %v251 = vld [vmem:[%s170 + $0x188] sm:$0xff]
        %v252 = vld [vmem:[%s170 + $0x190] sm:$0xff]
        %v253 = vld [vmem:[%s170 + $0x198] sm:$0xff]
        %v254 = vld [vmem:[%s170 + $0x1a0] sm:$0xff]
        %v255 = vld [vmem:[%s170 + $0x1a8] sm:$0xff]
        %v256 = vld [vmem:[%s170 + $0x1b0] sm:$0xff]
        %v257 = vld [vmem:[%s170 + $0x1b8] sm:$0xff]
        %v258 = vld [vmem:[%s170 + $0x1c0] sm:$0xff]
        %v259 = vld [vmem:[%s170 + $0x1c8] sm:$0xff]
        %v260 = vld [vmem:[%s170 + $0x1d0] sm:$0xff]
        %v261 = vld [vmem:[%s170 + $0x1d8] sm:$0xff]
        %v262 = vld [vmem:[%s170 + $0x1e0] sm:$0xff]
        %v263 = vld [vmem:[%s170 + $0x1e8] sm:$0xff]
        %v264 = vld [vmem:[%s170 + $0x1f0] sm:$0xff]
        %v265 = vld [vmem:[%s170 + $0x1f8] sm:$0xff]
        %v266 = vld [vmem:[%s170 + $0x200] sm:$0xff]
        %v267 = vld [vmem:[%s1] sm:$0x1]
        %s268 = sld [smem:[#allocation2]]
        %v270 = vlaneseq
        %v271 = vshrl.u32 %v270, 7
        %v272 = vsub.s32 0, %v271
        %v273 = vrot.slane %v267, %v272
        %v275 = vmul.f32 %v202, %v273
        %v276 = vmul.f32 %v203, %v273
        %v277 = vmul.f32 %v204, %v273
        %v278 = vmul.f32 %v205, %v273
        %v279 = vmul.f32 %v206, %v273
        %v280 = vmul.f32 %v207, %v273
        %v281 = vmul.f32 %v208, %v273
        %v282 = vmul.f32 %v209, %v273
        %v283 = vmul.f32 %v210, %v273
        %v284 = vmul.f32 %v211, %v273
        %v285 = vmul.f32 %v212, %v273
        %v286 = vmul.f32 %v213, %v273
        %v287 = vmul.f32 %v214, %v273
        %v288 = vmul.f32 %v215, %v273
        %v289 = vmul.f32 %v216, %v273
        %v290 = vmul.f32 %v217, %v273
        %v291 = vmul.f32 %v218, %v273
        %v292 = vmul.f32 %v219, %v273
        %v293 = vmul.f32 %v220, %v273
        %v294 = vmul.f32 %v221, %v273
        %v295 = vmul.f32 %v222, %v273
        %v296 = vmul.f32 %v223, %v273
        %v297 = vmul.f32 %v224, %v273
        %v298 = vmul.f32 %v225, %v273
        %v299 = vmul.f32 %v226, %v273
        %v300 = vmul.f32 %v227, %v273
        %v301 = vmul.f32 %v228, %v273
        %v302 = vmul.f32 %v229, %v273
        %v303 = vmul.f32 %v230, %v273
        %v304 = vmul.f32 %v231, %v273
        %v305 = vmul.f32 %v232, %v273
        %v306 = vmul.f32 %v233, %v273
        %v307 = vmul.f32 %v234, %v273
        %v308 = vmul.f32 %v235, %v273
        %v309 = vmul.f32 %v236, %v273
        %v310 = vmul.f32 %v237, %v273
        %v311 = vmul.f32 %v238, %v273
        %v312 = vmul.f32 %v239, %v273
        %v313 = vmul.f32 %v240, %v273
        %v314 = vmul.f32 %v241, %v273
        %v315 = vmul.f32 %v242, %v273
        %v316 = vmul.f32 %v243, %v273
        %v317 = vmul.f32 %v244, %v273
        %v318 = vmul.f32 %v245, %v273
        %v319 = vmul.f32 %v246, %v273
        %v320 = vmul.f32 %v247, %v273
        %v321 = vmul.f32 %v248, %v273
        %v322 = vmul.f32 %v249, %v273
        %v323 = vmul.f32 %v250, %v273
        %v324 = vmul.f32 %v251, %v273
        %v325 = vmul.f32 %v252, %v273
        %v326 = vmul.f32 %v253, %v273
        %v327 = vmul.f32 %v254, %v273
        %v328 = vmul.f32 %v255, %v273
        %v329 = vmul.f32 %v256, %v273
        %v330 = vmul.f32 %v257, %v273
        %v331 = vmul.f32 %v258, %v273
        %v332 = vmul.f32 %v259, %v273
        %v333 = vmul.f32 %v260, %v273
        %v334 = vmul.f32 %v261, %v273
        %v335 = vmul.f32 %v262, %v273
        %v336 = vmul.f32 %v263, %v273
        %v337 = vmul.f32 %v264, %v273
        %v338 = vmul.f32 %v265, %v273
        %v339 = vmul.f32 %v266, %v273
        %vm340 = vcmask 261120
        %v341 = vsel %vm340, %v275, 0.0
        %342 = vadd.xlane.f32.xlu0 %v341
        %v343 = vpop.xlane.xlu0 %342
        %v344 = vsel %vm340, %v276, 0.0
        %345 = vadd.xlane.f32.xlu0 %v344
        %v346 = vpop.xlane.xlu0 %345
        %v347 = vsel %vm340, %v277, 0.0
        %348 = vadd.xlane.f32.xlu0 %v347
        %v349 = vpop.xlane.xlu0 %348
        %v350 = vsel %vm340, %v278, 0.0
        %351 = vadd.xlane.f32.xlu0 %v350
        %v352 = vpop.xlane.xlu0 %351
        %v353 = vsel %vm340, %v279, 0.0
        %354 = vadd.xlane.f32.xlu0 %v353
        %v355 = vpop.xlane.xlu0 %354
        %v356 = vsel %vm340, %v280, 0.0
        %357 = vadd.xlane.f32.xlu0 %v356
        %v358 = vpop.xlane.xlu0 %357
        %v359 = vsel %vm340, %v281, 0.0
        %360 = vadd.xlane.f32.xlu0 %v359
        %v361 = vpop.xlane.xlu0 %360
        %v362 = vsel %vm340, %v282, 0.0
        %363 = vadd.xlane.f32.xlu0 %v362
        %v364 = vpop.xlane.xlu0 %363
        %v365 = vsel %vm340, %v283, 0.0
        %366 = vadd.xlane.f32.xlu0 %v365
        %v367 = vpop.xlane.xlu0 %366
        %v368 = vsel %vm340, %v284, 0.0
        %369 = vadd.xlane.f32.xlu0 %v368
        %v370 = vpop.xlane.xlu0 %369
        %v371 = vsel %vm340, %v285, 0.0
        %372 = vadd.xlane.f32.xlu0 %v371
        %v373 = vpop.xlane.xlu0 %372
        %v374 = vsel %vm340, %v286, 0.0
        %375 = vadd.xlane.f32.xlu0 %v374
        %v376 = vpop.xlane.xlu0 %375
        %v377 = vsel %vm340, %v287, 0.0
        %378 = vadd.xlane.f32.xlu0 %v377
        %v379 = vpop.xlane.xlu0 %378
        %v380 = vsel %vm340, %v288, 0.0
        %381 = vadd.xlane.f32.xlu0 %v380
        %v382 = vpop.xlane.xlu0 %381
        %v383 = vsel %vm340, %v289, 0.0
        %384 = vadd.xlane.f32.xlu0 %v383
        %v385 = vpop.xlane.xlu0 %384
        %v386 = vsel %vm340, %v290, 0.0
        %387 = vadd.xlane.f32.xlu0 %v386
        %v388 = vpop.xlane.xlu0 %387
        %v389 = vsel %vm340, %v291, 0.0
        %390 = vadd.xlane.f32.xlu0 %v389
        %v391 = vpop.xlane.xlu0 %390
        %v392 = vsel %vm340, %v292, 0.0
        %393 = vadd.xlane.f32.xlu0 %v392
        %v394 = vpop.xlane.xlu0 %393
        %v395 = vsel %vm340, %v293, 0.0
        %396 = vadd.xlane.f32.xlu0 %v395
        %v397 = vpop.xlane.xlu0 %396
        %v398 = vsel %vm340, %v294, 0.0
        %399 = vadd.xlane.f32.xlu0 %v398
        %v400 = vpop.xlane.xlu0 %399
        %v401 = vsel %vm340, %v295, 0.0
        %402 = vadd.xlane.f32.xlu0 %v401
        %v403 = vpop.xlane.xlu0 %402
        %v404 = vsel %vm340, %v296, 0.0
        %405 = vadd.xlane.f32.xlu0 %v404
        %v406 = vpop.xlane.xlu0 %405
        %v407 = vsel %vm340, %v297, 0.0
        %408 = vadd.xlane.f32.xlu0 %v407
        %v409 = vpop.xlane.xlu0 %408
        %v410 = vsel %vm340, %v298, 0.0
        %411 = vadd.xlane.f32.xlu0 %v410
        %v412 = vpop.xlane.xlu0 %411
        %v413 = vsel %vm340, %v299, 0.0
        %414 = vadd.xlane.f32.xlu0 %v413
        %v415 = vpop.xlane.xlu0 %414
        %v416 = vsel %vm340, %v300, 0.0
        %417 = vadd.xlane.f32.xlu0 %v416
        %v418 = vpop.xlane.xlu0 %417
        %v419 = vsel %vm340, %v301, 0.0
        %420 = vadd.xlane.f32.xlu0 %v419
        %v421 = vpop.xlane.xlu0 %420
        %v422 = vsel %vm340, %v302, 0.0
        %423 = vadd.xlane.f32.xlu0 %v422
        %v424 = vpop.xlane.xlu0 %423
        %v425 = vsel %vm340, %v303, 0.0
        %426 = vadd.xlane.f32.xlu0 %v425
        %v427 = vpop.xlane.xlu0 %426
        %v428 = vsel %vm340, %v304, 0.0
        %429 = vadd.xlane.f32.xlu0 %v428
        %v430 = vpop.xlane.xlu0 %429
        %v431 = vsel %vm340, %v305, 0.0
        %432 = vadd.xlane.f32.xlu0 %v431
        %v433 = vpop.xlane.xlu0 %432
        %v434 = vsel %vm340, %v306, 0.0
        %435 = vadd.xlane.f32.xlu0 %v434
        %v436 = vpop.xlane.xlu0 %435
        %v437 = vsel %vm340, %v307, 0.0
        %438 = vadd.xlane.f32.xlu0 %v437
        %v439 = vpop.xlane.xlu0 %438
        %v440 = vsel %vm340, %v308, 0.0
        %441 = vadd.xlane.f32.xlu0 %v440
        %v442 = vpop.xlane.xlu0 %441
        %v443 = vsel %vm340, %v309, 0.0
        %444 = vadd.xlane.f32.xlu0 %v443
        %v445 = vpop.xlane.xlu0 %444
        %v446 = vsel %vm340, %v310, 0.0
        %447 = vadd.xlane.f32.xlu0 %v446
        %v448 = vpop.xlane.xlu0 %447
        %v449 = vsel %vm340, %v311, 0.0
        %450 = vadd.xlane.f32.xlu0 %v449
        %v451 = vpop.xlane.xlu0 %450
        %v452 = vsel %vm340, %v312, 0.0
        %453 = vadd.xlane.f32.xlu0 %v452
        %v454 = vpop.xlane.xlu0 %453
        %v455 = vsel %vm340, %v313, 0.0
        %456 = vadd.xlane.f32.xlu0 %v455
        %v457 = vpop.xlane.xlu0 %456
        %v458 = vsel %vm340, %v314, 0.0
        %459 = vadd.xlane.f32.xlu0 %v458
        %v460 = vpop.xlane.xlu0 %459
        %v461 = vsel %vm340, %v315, 0.0
        %462 = vadd.xlane.f32.xlu0 %v461
        %v463 = vpop.xlane.xlu0 %462
        %v464 = vsel %vm340, %v316, 0.0
        %465 = vadd.xlane.f32.xlu0 %v464
        %v466 = vpop.xlane.xlu0 %465
        %v467 = vsel %vm340, %v317, 0.0
        %468 = vadd.xlane.f32.xlu0 %v467
        %v469 = vpop.xlane.xlu0 %468
        %v470 = vsel %vm340, %v318, 0.0
        %471 = vadd.xlane.f32.xlu0 %v470
        %v472 = vpop.xlane.xlu0 %471
        %v473 = vsel %vm340, %v319, 0.0
        %474 = vadd.xlane.f32.xlu0 %v473
        %v475 = vpop.xlane.xlu0 %474
        %v476 = vsel %vm340, %v320, 0.0
        %477 = vadd.xlane.f32.xlu0 %v476
        %v478 = vpop.xlane.xlu0 %477
        %v479 = vsel %vm340, %v321, 0.0
        %480 = vadd.xlane.f32.xlu0 %v479
        %v481 = vpop.xlane.xlu0 %480
        %v482 = vsel %vm340, %v322, 0.0
        %483 = vadd.xlane.f32.xlu0 %v482
        %v484 = vpop.xlane.xlu0 %483
        %v485 = vsel %vm340, %v323, 0.0
        %486 = vadd.xlane.f32.xlu0 %v485
        %v487 = vpop.xlane.xlu0 %486
        %v488 = vsel %vm340, %v324, 0.0
        %489 = vadd.xlane.f32.xlu0 %v488
        %v490 = vpop.xlane.xlu0 %489
        %v491 = vsel %vm340, %v325, 0.0
        %492 = vadd.xlane.f32.xlu0 %v491
        %v493 = vpop.xlane.xlu0 %492
        %v494 = vsel %vm340, %v326, 0.0
        %495 = vadd.xlane.f32.xlu0 %v494
        %v496 = vpop.xlane.xlu0 %495
        %v497 = vsel %vm340, %v327, 0.0
        %498 = vadd.xlane.f32.xlu0 %v497
        %v499 = vpop.xlane.xlu0 %498
        %v500 = vsel %vm340, %v328, 0.0
        %501 = vadd.xlane.f32.xlu0 %v500
        %v502 = vpop.xlane.xlu0 %501
        %v503 = vsel %vm340, %v329, 0.0
        %504 = vadd.xlane.f32.xlu0 %v503
        %v505 = vpop.xlane.xlu0 %504
        %v506 = vsel %vm340, %v330, 0.0
        %507 = vadd.xlane.f32.xlu0 %v506
        %v508 = vpop.xlane.xlu0 %507
        %v509 = vsel %vm340, %v331, 0.0
        %510 = vadd.xlane.f32.xlu0 %v509
        %v511 = vpop.xlane.xlu0 %510
        %v512 = vsel %vm340, %v332, 0.0
        %513 = vadd.xlane.f32.xlu0 %v512
        %v514 = vpop.xlane.xlu0 %513
        %v515 = vsel %vm340, %v333, 0.0
        %516 = vadd.xlane.f32.xlu0 %v515
        %v517 = vpop.xlane.xlu0 %516
        %v518 = vsel %vm340, %v334, 0.0
        %519 = vadd.xlane.f32.xlu0 %v518
        %v520 = vpop.xlane.xlu0 %519
        %v521 = vsel %vm340, %v335, 0.0
        %522 = vadd.xlane.f32.xlu0 %v521
        %v523 = vpop.xlane.xlu0 %522
        %v524 = vsel %vm340, %v336, 0.0
        %525 = vadd.xlane.f32.xlu0 %v524
        %v526 = vpop.xlane.xlu0 %525
        %v527 = vsel %vm340, %v337, 0.0
        %528 = vadd.xlane.f32.xlu0 %v527
        %v529 = vpop.xlane.xlu0 %528
        %v530 = vsel %vm340, %v338, 0.0
        %531 = vadd.xlane.f32.xlu0 %v530
        %v532 = vpop.xlane.xlu0 %531
        %v533 = vsel %vm340, %v339, 0.0
        %534 = vadd.xlane.f32.xlu0 %v533
        %v535 = vpop.xlane.xlu0 %534
        %601 = vrot.lane.b32.xlu0 %v275, 96
        %v602 = vpop.permute.xlu0 %601
        %603 = vrot.lane.b32.xlu0 %v276, 96
        %v604 = vpop.permute.xlu0 %603
        %605 = vrot.lane.b32.xlu0 %v277, 96
        %v606 = vpop.permute.xlu0 %605
        %607 = vrot.lane.b32.xlu0 %v278, 96
        %v608 = vpop.permute.xlu0 %607
        %609 = vrot.lane.b32.xlu0 %v279, 96
        %v610 = vpop.permute.xlu0 %609
        %611 = vrot.lane.b32.xlu0 %v280, 96
        %v612 = vpop.permute.xlu0 %611
        %613 = vrot.lane.b32.xlu0 %v281, 96
        %v614 = vpop.permute.xlu0 %613
        %615 = vrot.lane.b32.xlu0 %v282, 96
        %v616 = vpop.permute.xlu0 %615
        %617 = vrot.lane.b32.xlu0 %v283, 96
        %v618 = vpop.permute.xlu0 %617
        %619 = vrot.lane.b32.xlu0 %v284, 96
        %v620 = vpop.permute.xlu0 %619
        %621 = vrot.lane.b32.xlu0 %v285, 96
        %v622 = vpop.permute.xlu0 %621
        %623 = vrot.lane.b32.xlu0 %v286, 96
        %v624 = vpop.permute.xlu0 %623
        %625 = vrot.lane.b32.xlu0 %v287, 96
        %v626 = vpop.permute.xlu0 %625
        %627 = vrot.lane.b32.xlu0 %v288, 96
        %v628 = vpop.permute.xlu0 %627
        %629 = vrot.lane.b32.xlu0 %v289, 96
        %v630 = vpop.permute.xlu0 %629
        %631 = vrot.lane.b32.xlu0 %v290, 96
        %v632 = vpop.permute.xlu0 %631
        %633 = vrot.lane.b32.xlu0 %v291, 96
        %v634 = vpop.permute.xlu0 %633
        %635 = vrot.lane.b32.xlu0 %v292, 96
        %v636 = vpop.permute.xlu0 %635
        %637 = vrot.lane.b32.xlu0 %v293, 96
        %v638 = vpop.permute.xlu0 %637
        %639 = vrot.lane.b32.xlu0 %v294, 96
        %v640 = vpop.permute.xlu0 %639
        %641 = vrot.lane.b32.xlu0 %v295, 96
        %v642 = vpop.permute.xlu0 %641
        %643 = vrot.lane.b32.xlu0 %v296, 96
        %v644 = vpop.permute.xlu0 %643
        %645 = vrot.lane.b32.xlu0 %v297, 96
        %v646 = vpop.permute.xlu0 %645
        %647 = vrot.lane.b32.xlu0 %v298, 96
        %v648 = vpop.permute.xlu0 %647
        %649 = vrot.lane.b32.xlu0 %v299, 96
        %v650 = vpop.permute.xlu0 %649
        %651 = vrot.lane.b32.xlu0 %v300, 96
        %v652 = vpop.permute.xlu0 %651
        %653 = vrot.lane.b32.xlu0 %v301, 96
        %v654 = vpop.permute.xlu0 %653
        %655 = vrot.lane.b32.xlu0 %v302, 96
        %v656 = vpop.permute.xlu0 %655
        %657 = vrot.lane.b32.xlu0 %v303, 96
        %v658 = vpop.permute.xlu0 %657
        %659 = vrot.lane.b32.xlu0 %v304, 96
        %v660 = vpop.permute.xlu0 %659
        %661 = vrot.lane.b32.xlu0 %v305, 96
        %v662 = vpop.permute.xlu0 %661
        %663 = vrot.lane.b32.xlu0 %v306, 96
        %v664 = vpop.permute.xlu0 %663
        %665 = vrot.lane.b32.xlu0 %v307, 96
        %v666 = vpop.permute.xlu0 %665
        %667 = vrot.lane.b32.xlu0 %v308, 96
        %v668 = vpop.permute.xlu0 %667
        %669 = vrot.lane.b32.xlu0 %v309, 96
        %v670 = vpop.permute.xlu0 %669
        %671 = vrot.lane.b32.xlu0 %v310, 96
        %v672 = vpop.permute.xlu0 %671
        %673 = vrot.lane.b32.xlu0 %v311, 96
        %v674 = vpop.permute.xlu0 %673
        %675 = vrot.lane.b32.xlu0 %v312, 96
        %v676 = vpop.permute.xlu0 %675
        %677 = vrot.lane.b32.xlu0 %v313, 96
        %v678 = vpop.permute.xlu0 %677
        %679 = vrot.lane.b32.xlu0 %v314, 96
        %v680 = vpop.permute.xlu0 %679
        %681 = vrot.lane.b32.xlu0 %v315, 96
        %v682 = vpop.permute.xlu0 %681
        %683 = vrot.lane.b32.xlu0 %v316, 96
        %v684 = vpop.permute.xlu0 %683
        %685 = vrot.lane.b32.xlu0 %v317, 96
        %v686 = vpop.permute.xlu0 %685
        %687 = vrot.lane.b32.xlu0 %v318, 96
        %v688 = vpop.permute.xlu0 %687
        %689 = vrot.lane.b32.xlu0 %v319, 96
        %v690 = vpop.permute.xlu0 %689
        %691 = vrot.lane.b32.xlu0 %v320, 96
        %v692 = vpop.permute.xlu0 %691
        %693 = vrot.lane.b32.xlu0 %v321, 96
        %v694 = vpop.permute.xlu0 %693
        %695 = vrot.lane.b32.xlu0 %v322, 96
        %v696 = vpop.permute.xlu0 %695
        %697 = vrot.lane.b32.xlu0 %v323, 96
        %v698 = vpop.permute.xlu0 %697
        %699 = vrot.lane.b32.xlu0 %v324, 96
        %v700 = vpop.permute.xlu0 %699
        %701 = vrot.lane.b32.xlu0 %v325, 96
        %v702 = vpop.permute.xlu0 %701
        %703 = vrot.lane.b32.xlu0 %v326, 96
        %v704 = vpop.permute.xlu0 %703
        %705 = vrot.lane.b32.xlu0 %v327, 96
        %v706 = vpop.permute.xlu0 %705
        %707 = vrot.lane.b32.xlu0 %v328, 96
        %v708 = vpop.permute.xlu0 %707
        %709 = vrot.lane.b32.xlu0 %v329, 96
        %v710 = vpop.permute.xlu0 %709
        %711 = vrot.lane.b32.xlu0 %v330, 96
        %v712 = vpop.permute.xlu0 %711
        %713 = vrot.lane.b32.xlu0 %v331, 96
        %v714 = vpop.permute.xlu0 %713
        %715 = vrot.lane.b32.xlu0 %v332, 96
        %v716 = vpop.permute.xlu0 %715
        %717 = vrot.lane.b32.xlu0 %v333, 96
        %v718 = vpop.permute.xlu0 %717
        %719 = vrot.lane.b32.xlu0 %v334, 96
        %v720 = vpop.permute.xlu0 %719
        %721 = vrot.lane.b32.xlu0 %v335, 96
        %v722 = vpop.permute.xlu0 %721
        %723 = vrot.lane.b32.xlu0 %v336, 96
        %v724 = vpop.permute.xlu0 %723
        %725 = vrot.lane.b32.xlu0 %v337, 96
        %v726 = vpop.permute.xlu0 %725
        %727 = vrot.lane.b32.xlu0 %v338, 96
        %v728 = vpop.permute.xlu0 %727
        %729 = vrot.lane.b32.xlu0 %v339, 96
        %v730 = vpop.permute.xlu0 %729
        %v796 = vsel %vm340, %v602, 0.0
        %797 = vadd.xlane.f32.xlu0 %v796
        %v798 = vpop.xlane.xlu0 %797
        %v799 = vsel %vm340, %v604, 0.0
        %800 = vadd.xlane.f32.xlu0 %v799
        %v801 = vpop.xlane.xlu0 %800
        %v802 = vsel %vm340, %v606, 0.0
        %803 = vadd.xlane.f32.xlu0 %v802
        %v804 = vpop.xlane.xlu0 %803
        %v805 = vsel %vm340, %v608, 0.0
        %806 = vadd.xlane.f32.xlu0 %v805
        %v807 = vpop.xlane.xlu0 %806
        %v808 = vsel %vm340, %v610, 0.0
        %809 = vadd.xlane.f32.xlu0 %v808
        %v810 = vpop.xlane.xlu0 %809
        %v811 = vsel %vm340, %v612, 0.0
        %812 = vadd.xlane.f32.xlu0 %v811
        %v813 = vpop.xlane.xlu0 %812
        %v814 = vsel %vm340, %v614, 0.0
        %815 = vadd.xlane.f32.xlu0 %v814
        %v816 = vpop.xlane.xlu0 %815
        %v817 = vsel %vm340, %v616, 0.0
        %818 = vadd.xlane.f32.xlu0 %v817
        %v819 = vpop.xlane.xlu0 %818
        %v820 = vsel %vm340, %v618, 0.0
        %821 = vadd.xlane.f32.xlu0 %v820
        %v822 = vpop.xlane.xlu0 %821
        %v823 = vsel %vm340, %v620, 0.0
        %824 = vadd.xlane.f32.xlu0 %v823
        %v825 = vpop.xlane.xlu0 %824
        %v826 = vsel %vm340, %v622, 0.0
        %827 = vadd.xlane.f32.xlu0 %v826
        %v828 = vpop.xlane.xlu0 %827
        %v829 = vsel %vm340, %v624, 0.0
        %830 = vadd.xlane.f32.xlu0 %v829
        %v831 = vpop.xlane.xlu0 %830
        %v832 = vsel %vm340, %v626, 0.0
        %833 = vadd.xlane.f32.xlu0 %v832
        %v834 = vpop.xlane.xlu0 %833
        %v835 = vsel %vm340, %v628, 0.0
        %836 = vadd.xlane.f32.xlu0 %v835
        %v837 = vpop.xlane.xlu0 %836
        %v838 = vsel %vm340, %v630, 0.0
        %839 = vadd.xlane.f32.xlu0 %v838
        %v840 = vpop.xlane.xlu0 %839
        %v841 = vsel %vm340, %v632, 0.0
        %842 = vadd.xlane.f32.xlu0 %v841
        %v843 = vpop.xlane.xlu0 %842
        %v844 = vsel %vm340, %v634, 0.0
        %845 = vadd.xlane.f32.xlu0 %v844
        %v846 = vpop.xlane.xlu0 %845
        %v847 = vsel %vm340, %v636, 0.0
        %848 = vadd.xlane.f32.xlu0 %v847
        %v849 = vpop.xlane.xlu0 %848
        %v850 = vsel %vm340, %v638, 0.0
        %851 = vadd.xlane.f32.xlu0 %v850
        %v852 = vpop.xlane.xlu0 %851
        %v853 = vsel %vm340, %v640, 0.0
        %854 = vadd.xlane.f32.xlu0 %v853
        %v855 = vpop.xlane.xlu0 %854
        %v856 = vsel %vm340, %v642, 0.0
        %857 = vadd.xlane.f32.xlu0 %v856
        %v858 = vpop.xlane.xlu0 %857
        %v859 = vsel %vm340, %v644, 0.0
        %860 = vadd.xlane.f32.xlu0 %v859
        %v861 = vpop.xlane.xlu0 %860
        %v862 = vsel %vm340, %v646, 0.0
        %863 = vadd.xlane.f32.xlu0 %v862
        %v864 = vpop.xlane.xlu0 %863
        %v865 = vsel %vm340, %v648, 0.0
        %866 = vadd.xlane.f32.xlu0 %v865
        %v867 = vpop.xlane.xlu0 %866
        %v868 = vsel %vm340, %v650, 0.0
        %869 = vadd.xlane.f32.xlu0 %v868
        %v870 = vpop.xlane.xlu0 %869
        %v871 = vsel %vm340, %v652, 0.0
        %872 = vadd.xlane.f32.xlu0 %v871
        %v873 = vpop.xlane.xlu0 %872
        %v874 = vsel %vm340, %v654, 0.0
        %875 = vadd.xlane.f32.xlu0 %v874
        %v876 = vpop.xlane.xlu0 %875
        %v877 = vsel %vm340, %v656, 0.0
        %878 = vadd.xlane.f32.xlu0 %v877
        %v879 = vpop.xlane.xlu0 %878
        %v880 = vsel %vm340, %v658, 0.0
        %881 = vadd.xlane.f32.xlu0 %v880
        %v882 = vpop.xlane.xlu0 %881
        %v883 = vsel %vm340, %v660, 0.0
        %884 = vadd.xlane.f32.xlu0 %v883
        %v885 = vpop.xlane.xlu0 %884
        %v886 = vsel %vm340, %v662, 0.0
        %887 = vadd.xlane.f32.xlu0 %v886
        %v888 = vpop.xlane.xlu0 %887
        %v889 = vsel %vm340, %v664, 0.0
        %890 = vadd.xlane.f32.xlu0 %v889
        %v891 = vpop.xlane.xlu0 %890
        %v892 = vsel %vm340, %v666, 0.0
        %893 = vadd.xlane.f32.xlu0 %v892
        %v894 = vpop.xlane.xlu0 %893
        %v895 = vsel %vm340, %v668, 0.0
        %896 = vadd.xlane.f32.xlu0 %v895
        %v897 = vpop.xlane.xlu0 %896
        %v898 = vsel %vm340, %v670, 0.0
        %899 = vadd.xlane.f32.xlu0 %v898
        %v900 = vpop.xlane.xlu0 %899
        %v901 = vsel %vm340, %v672, 0.0
        %902 = vadd.xlane.f32.xlu0 %v901
        %v903 = vpop.xlane.xlu0 %902
        %v904 = vsel %vm340, %v674, 0.0
        %905 = vadd.xlane.f32.xlu0 %v904
        %v906 = vpop.xlane.xlu0 %905
        %v907 = vsel %vm340, %v676, 0.0
        %908 = vadd.xlane.f32.xlu0 %v907
        %v909 = vpop.xlane.xlu0 %908
        %v910 = vsel %vm340, %v678, 0.0
        %911 = vadd.xlane.f32.xlu0 %v910
        %v912 = vpop.xlane.xlu0 %911
        %v913 = vsel %vm340, %v680, 0.0
        %914 = vadd.xlane.f32.xlu0 %v913
        %v915 = vpop.xlane.xlu0 %914
        %v916 = vsel %vm340, %v682, 0.0
        %917 = vadd.xlane.f32.xlu0 %v916
        %v918 = vpop.xlane.xlu0 %917
        %v919 = vsel %vm340, %v684, 0.0
        %920 = vadd.xlane.f32.xlu0 %v919
        %v921 = vpop.xlane.xlu0 %920
        %v922 = vsel %vm340, %v686, 0.0
        %923 = vadd.xlane.f32.xlu0 %v922
        %v924 = vpop.xlane.xlu0 %923
        %v925 = vsel %vm340, %v688, 0.0
        %926 = vadd.xlane.f32.xlu0 %v925
        %v927 = vpop.xlane.xlu0 %926
        %v928 = vsel %vm340, %v690, 0.0
        %929 = vadd.xlane.f32.xlu0 %v928
        %v930 = vpop.xlane.xlu0 %929
        %v931 = vsel %vm340, %v692, 0.0
        %932 = vadd.xlane.f32.xlu0 %v931
        %v933 = vpop.xlane.xlu0 %932
        %v934 = vsel %vm340, %v694, 0.0
        %935 = vadd.xlane.f32.xlu0 %v934
        %v936 = vpop.xlane.xlu0 %935
        %v937 = vsel %vm340, %v696, 0.0
        %938 = vadd.xlane.f32.xlu0 %v937
        %v939 = vpop.xlane.xlu0 %938
        %v940 = vsel %vm340, %v698, 0.0
        %941 = vadd.xlane.f32.xlu0 %v940
        %v942 = vpop.xlane.xlu0 %941
        %v943 = vsel %vm340, %v700, 0.0
        %944 = vadd.xlane.f32.xlu0 %v943
        %v945 = vpop.xlane.xlu0 %944
        %v946 = vsel %vm340, %v702, 0.0
        %947 = vadd.xlane.f32.xlu0 %v946
        %v948 = vpop.xlane.xlu0 %947
        %v949 = vsel %vm340, %v704, 0.0
        %950 = vadd.xlane.f32.xlu0 %v949
        %v951 = vpop.xlane.xlu0 %950
        %v952 = vsel %vm340, %v706, 0.0
        %953 = vadd.xlane.f32.xlu0 %v952
        %v954 = vpop.xlane.xlu0 %953
        %v955 = vsel %vm340, %v708, 0.0
        %956 = vadd.xlane.f32.xlu0 %v955
        %v957 = vpop.xlane.xlu0 %956
        %v958 = vsel %vm340, %v710, 0.0
        %959 = vadd.xlane.f32.xlu0 %v958
        %v960 = vpop.xlane.xlu0 %959
        %v961 = vsel %vm340, %v712, 0.0
        %962 = vadd.xlane.f32.xlu0 %v961
        %v963 = vpop.xlane.xlu0 %962
        %v964 = vsel %vm340, %v714, 0.0
        %965 = vadd.xlane.f32.xlu0 %v964
        %v966 = vpop.xlane.xlu0 %965
        %v967 = vsel %vm340, %v716, 0.0
        %968 = vadd.xlane.f32.xlu0 %v967
        %v969 = vpop.xlane.xlu0 %968
        %v970 = vsel %vm340, %v718, 0.0
        %971 = vadd.xlane.f32.xlu0 %v970
        %v972 = vpop.xlane.xlu0 %971
        %v973 = vsel %vm340, %v720, 0.0
        %974 = vadd.xlane.f32.xlu0 %v973
        %v975 = vpop.xlane.xlu0 %974
        %v976 = vsel %vm340, %v722, 0.0
        %977 = vadd.xlane.f32.xlu0 %v976
        %v978 = vpop.xlane.xlu0 %977
        %v979 = vsel %vm340, %v724, 0.0
        %980 = vadd.xlane.f32.xlu0 %v979
        %v981 = vpop.xlane.xlu0 %980
        %v982 = vsel %vm340, %v726, 0.0
        %983 = vadd.xlane.f32.xlu0 %v982
        %v984 = vpop.xlane.xlu0 %983
        %v985 = vsel %vm340, %v728, 0.0
        %986 = vadd.xlane.f32.xlu0 %v985
        %v987 = vpop.xlane.xlu0 %986
        %v988 = vsel %vm340, %v730, 0.0
        %989 = vadd.xlane.f32.xlu0 %v988
        %v990 = vpop.xlane.xlu0 %989
        %991 = vrot.lane.b32.xlu0 %v275, 64
        %v992 = vpop.permute.xlu0 %991
        %993 = vrot.lane.b32.xlu0 %v276, 64
        %v994 = vpop.permute.xlu0 %993
        %995 = vrot.lane.b32.xlu0 %v277, 64
        %v996 = vpop.permute.xlu0 %995
        %997 = vrot.lane.b32.xlu0 %v278, 64
        %v998 = vpop.permute.xlu0 %997
        %999 = vrot.lane.b32.xlu0 %v279, 64
        %v1000 = vpop.permute.xlu0 %999
        %1001 = vrot.lane.b32.xlu0 %v280, 64
        %v1002 = vpop.permute.xlu0 %1001
        %1003 = vrot.lane.b32.xlu0 %v281, 64
        %v1004 = vpop.permute.xlu0 %1003
        %1005 = vrot.lane.b32.xlu0 %v282, 64
        %v1006 = vpop.permute.xlu0 %1005
        %1007 = vrot.lane.b32.xlu0 %v283, 64
        %v1008 = vpop.permute.xlu0 %1007
        %1009 = vrot.lane.b32.xlu0 %v284, 64
        %v1010 = vpop.permute.xlu0 %1009
        %1011 = vrot.lane.b32.xlu0 %v285, 64
        %v1012 = vpop.permute.xlu0 %1011
        %1013 = vrot.lane.b32.xlu0 %v286, 64
        %v1014 = vpop.permute.xlu0 %1013
        %1015 = vrot.lane.b32.xlu0 %v287, 64
        %v1016 = vpop.permute.xlu0 %1015
        %1017 = vrot.lane.b32.xlu0 %v288, 64
        %v1018 = vpop.permute.xlu0 %1017
        %1019 = vrot.lane.b32.xlu0 %v289, 64
        %v1020 = vpop.permute.xlu0 %1019
        %1021 = vrot.lane.b32.xlu0 %v290, 64
        %v1022 = vpop.permute.xlu0 %1021
        %1023 = vrot.lane.b32.xlu0 %v291, 64
        %v1024 = vpop.permute.xlu0 %1023
        %1025 = vrot.lane.b32.xlu0 %v292, 64
        %v1026 = vpop.permute.xlu0 %1025
        %1027 = vrot.lane.b32.xlu0 %v293, 64
        %v1028 = vpop.permute.xlu0 %1027
        %1029 = vrot.lane.b32.xlu0 %v294, 64
        %v1030 = vpop.permute.xlu0 %1029
        %1031 = vrot.lane.b32.xlu0 %v295, 64
        %v1032 = vpop.permute.xlu0 %1031
        %1033 = vrot.lane.b32.xlu0 %v296, 64
        %v1034 = vpop.permute.xlu0 %1033
        %1035 = vrot.lane.b32.xlu0 %v297, 64
        %v1036 = vpop.permute.xlu0 %1035
        %1037 = vrot.lane.b32.xlu0 %v298, 64
        %v1038 = vpop.permute.xlu0 %1037
        %1039 = vrot.lane.b32.xlu0 %v299, 64
        %v1040 = vpop.permute.xlu0 %1039
        %1041 = vrot.lane.b32.xlu0 %v300, 64
        %v1042 = vpop.permute.xlu0 %1041
        %1043 = vrot.lane.b32.xlu0 %v301, 64
        %v1044 = vpop.permute.xlu0 %1043
        %1045 = vrot.lane.b32.xlu0 %v302, 64
        %v1046 = vpop.permute.xlu0 %1045
        %1047 = vrot.lane.b32.xlu0 %v303, 64
        %v1048 = vpop.permute.xlu0 %1047
        %1049 = vrot.lane.b32.xlu0 %v304, 64
        %v1050 = vpop.permute.xlu0 %1049
        %1051 = vrot.lane.b32.xlu0 %v305, 64
        %v1052 = vpop.permute.xlu0 %1051
        %1053 = vrot.lane.b32.xlu0 %v306, 64
        %v1054 = vpop.permute.xlu0 %1053
        %1055 = vrot.lane.b32.xlu0 %v307, 64
        %v1056 = vpop.permute.xlu0 %1055
        %1057 = vrot.lane.b32.xlu0 %v308, 64
        %v1058 = vpop.permute.xlu0 %1057
        %1059 = vrot.lane.b32.xlu0 %v309, 64
        %v1060 = vpop.permute.xlu0 %1059
        %1061 = vrot.lane.b32.xlu0 %v310, 64
        %v1062 = vpop.permute.xlu0 %1061
        %1063 = vrot.lane.b32.xlu0 %v311, 64
        %v1064 = vpop.permute.xlu0 %1063
        %1065 = vrot.lane.b32.xlu0 %v312, 64
        %v1066 = vpop.permute.xlu0 %1065
        %1067 = vrot.lane.b32.xlu0 %v313, 64
        %v1068 = vpop.permute.xlu0 %1067
        %1069 = vrot.lane.b32.xlu0 %v314, 64
        %v1070 = vpop.permute.xlu0 %1069
        %1071 = vrot.lane.b32.xlu0 %v315, 64
        %v1072 = vpop.permute.xlu0 %1071
        %1073 = vrot.lane.b32.xlu0 %v316, 64
        %v1074 = vpop.permute.xlu0 %1073
        %1075 = vrot.lane.b32.xlu0 %v317, 64
        %v1076 = vpop.permute.xlu0 %1075
        %1077 = vrot.lane.b32.xlu0 %v318, 64
        %v1078 = vpop.permute.xlu0 %1077
        %1079 = vrot.lane.b32.xlu0 %v319, 64
        %v1080 = vpop.permute.xlu0 %1079
        %1081 = vrot.lane.b32.xlu0 %v320, 64
        %v1082 = vpop.permute.xlu0 %1081
        %1083 = vrot.lane.b32.xlu0 %v321, 64
        %v1084 = vpop.permute.xlu0 %1083
        %1085 = vrot.lane.b32.xlu0 %v322, 64
        %v1086 = vpop.permute.xlu0 %1085
        %1087 = vrot.lane.b32.xlu0 %v323, 64
        %v1088 = vpop.permute.xlu0 %1087
        %1089 = vrot.lane.b32.xlu0 %v324, 64
        %v1090 = vpop.permute.xlu0 %1089
        %1091 = vrot.lane.b32.xlu0 %v325, 64
        %v1092 = vpop.permute.xlu0 %1091
        %1093 = vrot.lane.b32.xlu0 %v326, 64
        %v1094 = vpop.permute.xlu0 %1093
        %1095 = vrot.lane.b32.xlu0 %v327, 64
        %v1096 = vpop.permute.xlu0 %1095
        %1097 = vrot.lane.b32.xlu0 %v328, 64
        %v1098 = vpop.permute.xlu0 %1097
        %1099 = vrot.lane.b32.xlu0 %v329, 64
        %v1100 = vpop.permute.xlu0 %1099
        %1101 = vrot.lane.b32.xlu0 %v330, 64
        %v1102 = vpop.permute.xlu0 %1101
        %1103 = vrot.lane.b32.xlu0 %v331, 64
        %v1104 = vpop.permute.xlu0 %1103
        %1105 = vrot.lane.b32.xlu0 %v332, 64
        %v1106 = vpop.permute.xlu0 %1105
        %1107 = vrot.lane.b32.xlu0 %v333, 64
        %v1108 = vpop.permute.xlu0 %1107
        %1109 = vrot.lane.b32.xlu0 %v334, 64
        %v1110 = vpop.permute.xlu0 %1109
        %1111 = vrot.lane.b32.xlu0 %v335, 64
        %v1112 = vpop.permute.xlu0 %1111
        %1113 = vrot.lane.b32.xlu0 %v336, 64
        %v1114 = vpop.permute.xlu0 %1113
        %1115 = vrot.lane.b32.xlu0 %v337, 64
        %v1116 = vpop.permute.xlu0 %1115
        %1117 = vrot.lane.b32.xlu0 %v338, 64
        %v1118 = vpop.permute.xlu0 %1117
        %1119 = vrot.lane.b32.xlu0 %v339, 64
        %v1120 = vpop.permute.xlu0 %1119
        %v1186 = vsel %vm340, %v992, 0.0
        %1187 = vadd.xlane.f32.xlu0 %v1186
        %v1188 = vpop.xlane.xlu0 %1187
        %v1189 = vsel %vm340, %v994, 0.0
        %1190 = vadd.xlane.f32.xlu0 %v1189
        %v1191 = vpop.xlane.xlu0 %1190
        %v1192 = vsel %vm340, %v996, 0.0
        %1193 = vadd.xlane.f32.xlu0 %v1192
        %v1194 = vpop.xlane.xlu0 %1193
        %v1195 = vsel %vm340, %v998, 0.0
        %1196 = vadd.xlane.f32.xlu0 %v1195
        %v1197 = vpop.xlane.xlu0 %1196
        %v1198 = vsel %vm340, %v1000, 0.0
        %1199 = vadd.xlane.f32.xlu0 %v1198
        %v1200 = vpop.xlane.xlu0 %1199
        %v1201 = vsel %vm340, %v1002, 0.0
        %1202 = vadd.xlane.f32.xlu0 %v1201
        %v1203 = vpop.xlane.xlu0 %1202
        %v1204 = vsel %vm340, %v1004, 0.0
        %1205 = vadd.xlane.f32.xlu0 %v1204
        %v1206 = vpop.xlane.xlu0 %1205
        %v1207 = vsel %vm340, %v1006, 0.0
        %1208 = vadd.xlane.f32.xlu0 %v1207
        %v1209 = vpop.xlane.xlu0 %1208
        %v1210 = vsel %vm340, %v1008, 0.0
        %1211 = vadd.xlane.f32.xlu0 %v1210
        %v1212 = vpop.xlane.xlu0 %1211
        %v1213 = vsel %vm340, %v1010, 0.0
        %1214 = vadd.xlane.f32.xlu0 %v1213
        %v1215 = vpop.xlane.xlu0 %1214
        %v1216 = vsel %vm340, %v1012, 0.0
        %1217 = vadd.xlane.f32.xlu0 %v1216
        %v1218 = vpop.xlane.xlu0 %1217
        %v1219 = vsel %vm340, %v1014, 0.0
        %1220 = vadd.xlane.f32.xlu0 %v1219
        %v1221 = vpop.xlane.xlu0 %1220
        %v1222 = vsel %vm340, %v1016, 0.0
        %1223 = vadd.xlane.f32.xlu0 %v1222
        %v1224 = vpop.xlane.xlu0 %1223
        %v1225 = vsel %vm340, %v1018, 0.0
        %1226 = vadd.xlane.f32.xlu0 %v1225
        %v1227 = vpop.xlane.xlu0 %1226
        %v1228 = vsel %vm340, %v1020, 0.0
        %1229 = vadd.xlane.f32.xlu0 %v1228
        %v1230 = vpop.xlane.xlu0 %1229
        %v1231 = vsel %vm340, %v1022, 0.0
        %1232 = vadd.xlane.f32.xlu0 %v1231
        %v1233 = vpop.xlane.xlu0 %1232
        %v1234 = vsel %vm340, %v1024, 0.0
        %1235 = vadd.xlane.f32.xlu0 %v1234
        %v1236 = vpop.xlane.xlu0 %1235
        %v1237 = vsel %vm340, %v1026, 0.0
        %1238 = vadd.xlane.f32.xlu0 %v1237
        %v1239 = vpop.xlane.xlu0 %1238
        %v1240 = vsel %vm340, %v1028, 0.0
        %1241 = vadd.xlane.f32.xlu0 %v1240
        %v1242 = vpop.xlane.xlu0 %1241
        %v1243 = vsel %vm340, %v1030, 0.0
        %1244 = vadd.xlane.f32.xlu0 %v1243
        %v1245 = vpop.xlane.xlu0 %1244
        %v1246 = vsel %vm340, %v1032, 0.0
        %1247 = vadd.xlane.f32.xlu0 %v1246
        %v1248 = vpop.xlane.xlu0 %1247
        %v1249 = vsel %vm340, %v1034, 0.0
        %1250 = vadd.xlane.f32.xlu0 %v1249
        %v1251 = vpop.xlane.xlu0 %1250
        %v1252 = vsel %vm340, %v1036, 0.0
        %1253 = vadd.xlane.f32.xlu0 %v1252
        %v1254 = vpop.xlane.xlu0 %1253
        %v1255 = vsel %vm340, %v1038, 0.0
        %1256 = vadd.xlane.f32.xlu0 %v1255
        %v1257 = vpop.xlane.xlu0 %1256
        %v1258 = vsel %vm340, %v1040, 0.0
        %1259 = vadd.xlane.f32.xlu0 %v1258
        %v1260 = vpop.xlane.xlu0 %1259
        %v1261 = vsel %vm340, %v1042, 0.0
        %1262 = vadd.xlane.f32.xlu0 %v1261
        %v1263 = vpop.xlane.xlu0 %1262
        %v1264 = vsel %vm340, %v1044, 0.0
        %1265 = vadd.xlane.f32.xlu0 %v1264
        %v1266 = vpop.xlane.xlu0 %1265
        %v1267 = vsel %vm340, %v1046, 0.0
        %1268 = vadd.xlane.f32.xlu0 %v1267
        %v1269 = vpop.xlane.xlu0 %1268
        %v1270 = vsel %vm340, %v1048, 0.0
        %1271 = vadd.xlane.f32.xlu0 %v1270
        %v1272 = vpop.xlane.xlu0 %1271
        %v1273 = vsel %vm340, %v1050, 0.0
        %1274 = vadd.xlane.f32.xlu0 %v1273
        %v1275 = vpop.xlane.xlu0 %1274
        %v1276 = vsel %vm340, %v1052, 0.0
        %1277 = vadd.xlane.f32.xlu0 %v1276
        %v1278 = vpop.xlane.xlu0 %1277
        %v1279 = vsel %vm340, %v1054, 0.0
        %1280 = vadd.xlane.f32.xlu0 %v1279
        %v1281 = vpop.xlane.xlu0 %1280
        %v1282 = vsel %vm340, %v1056, 0.0
        %1283 = vadd.xlane.f32.xlu0 %v1282
        %v1284 = vpop.xlane.xlu0 %1283
        %v1285 = vsel %vm340, %v1058, 0.0
        %1286 = vadd.xlane.f32.xlu0 %v1285
        %v1287 = vpop.xlane.xlu0 %1286
        %v1288 = vsel %vm340, %v1060, 0.0
        %1289 = vadd.xlane.f32.xlu0 %v1288
        %v1290 = vpop.xlane.xlu0 %1289
        %v1291 = vsel %vm340, %v1062, 0.0
        %1292 = vadd.xlane.f32.xlu0 %v1291
        %v1293 = vpop.xlane.xlu0 %1292
        %v1294 = vsel %vm340, %v1064, 0.0
        %1295 = vadd.xlane.f32.xlu0 %v1294
        %v1296 = vpop.xlane.xlu0 %1295
        %v1297 = vsel %vm340, %v1066, 0.0
        %1298 = vadd.xlane.f32.xlu0 %v1297
        %v1299 = vpop.xlane.xlu0 %1298
        %v1300 = vsel %vm340, %v1068, 0.0
        %1301 = vadd.xlane.f32.xlu0 %v1300
        %v1302 = vpop.xlane.xlu0 %1301
        %v1303 = vsel %vm340, %v1070, 0.0
        %1304 = vadd.xlane.f32.xlu0 %v1303
        %v1305 = vpop.xlane.xlu0 %1304
        %v1306 = vsel %vm340, %v1072, 0.0
        %1307 = vadd.xlane.f32.xlu0 %v1306
        %v1308 = vpop.xlane.xlu0 %1307
        %v1309 = vsel %vm340, %v1074, 0.0
        %1310 = vadd.xlane.f32.xlu0 %v1309
        %v1311 = vpop.xlane.xlu0 %1310
        %v1312 = vsel %vm340, %v1076, 0.0
        %1313 = vadd.xlane.f32.xlu0 %v1312
        %v1314 = vpop.xlane.xlu0 %1313
        %v1315 = vsel %vm340, %v1078, 0.0
        %1316 = vadd.xlane.f32.xlu0 %v1315
        %v1317 = vpop.xlane.xlu0 %1316
        %v1318 = vsel %vm340, %v1080, 0.0
        %1319 = vadd.xlane.f32.xlu0 %v1318
        %v1320 = vpop.xlane.xlu0 %1319
        %v1321 = vsel %vm340, %v1082, 0.0
        %1322 = vadd.xlane.f32.xlu0 %v1321
        %v1323 = vpop.xlane.xlu0 %1322
        %v1324 = vsel %vm340, %v1084, 0.0
        %1325 = vadd.xlane.f32.xlu0 %v1324
        %v1326 = vpop.xlane.xlu0 %1325
        %v1327 = vsel %vm340, %v1086, 0.0
        %1328 = vadd.xlane.f32.xlu0 %v1327
        %v1329 = vpop.xlane.xlu0 %1328
        %v1330 = vsel %vm340, %v1088, 0.0
        %1331 = vadd.xlane.f32.xlu0 %v1330
        %v1332 = vpop.xlane.xlu0 %1331
        %v1333 = vsel %vm340, %v1090, 0.0
        %1334 = vadd.xlane.f32.xlu0 %v1333
        %v1335 = vpop.xlane.xlu0 %1334
        %v1336 = vsel %vm340, %v1092, 0.0
        %1337 = vadd.xlane.f32.xlu0 %v1336
        %v1338 = vpop.xlane.xlu0 %1337
        %v1339 = vsel %vm340, %v1094, 0.0
        %1340 = vadd.xlane.f32.xlu0 %v1339
        %v1341 = vpop.xlane.xlu0 %1340
        %v1342 = vsel %vm340, %v1096, 0.0
        %1343 = vadd.xlane.f32.xlu0 %v1342
        %v1344 = vpop.xlane.xlu0 %1343
        %v1345 = vsel %vm340, %v1098, 0.0
        %1346 = vadd.xlane.f32.xlu0 %v1345
        %v1347 = vpop.xlane.xlu0 %1346
        %v1348 = vsel %vm340, %v1100, 0.0
        %1349 = vadd.xlane.f32.xlu0 %v1348
        %v1350 = vpop.xlane.xlu0 %1349
        %v1351 = vsel %vm340, %v1102, 0.0
        %1352 = vadd.xlane.f32.xlu0 %v1351
        %v1353 = vpop.xlane.xlu0 %1352
        %v1354 = vsel %vm340, %v1104, 0.0
        %1355 = vadd.xlane.f32.xlu0 %v1354
        %v1356 = vpop.xlane.xlu0 %1355
        %v1357 = vsel %vm340, %v1106, 0.0
        %1358 = vadd.xlane.f32.xlu0 %v1357
        %v1359 = vpop.xlane.xlu0 %1358
        %v1360 = vsel %vm340, %v1108, 0.0
        %1361 = vadd.xlane.f32.xlu0 %v1360
        %v1362 = vpop.xlane.xlu0 %1361
        %v1363 = vsel %vm340, %v1110, 0.0
        %1364 = vadd.xlane.f32.xlu0 %v1363
        %v1365 = vpop.xlane.xlu0 %1364
        %v1366 = vsel %vm340, %v1112, 0.0
        %1367 = vadd.xlane.f32.xlu0 %v1366
        %v1368 = vpop.xlane.xlu0 %1367
        %v1369 = vsel %vm340, %v1114, 0.0
        %1370 = vadd.xlane.f32.xlu0 %v1369
        %v1371 = vpop.xlane.xlu0 %1370
        %v1372 = vsel %vm340, %v1116, 0.0
        %1373 = vadd.xlane.f32.xlu0 %v1372
        %v1374 = vpop.xlane.xlu0 %1373
        %v1375 = vsel %vm340, %v1118, 0.0
        %1376 = vadd.xlane.f32.xlu0 %v1375
        %v1377 = vpop.xlane.xlu0 %1376
        %v1378 = vsel %vm340, %v1120, 0.0
        %1379 = vadd.xlane.f32.xlu0 %v1378
        %v1380 = vpop.xlane.xlu0 %1379
        %1381 = vrot.lane.b32.xlu0 %v275, 32
        %v1382 = vpop.permute.xlu0 %1381
        %1383 = vrot.lane.b32.xlu0 %v276, 32
        %v1384 = vpop.permute.xlu0 %1383
        %1385 = vrot.lane.b32.xlu0 %v277, 32
        %v1386 = vpop.permute.xlu0 %1385
        %1387 = vrot.lane.b32.xlu0 %v278, 32
        %v1388 = vpop.permute.xlu0 %1387
        %1389 = vrot.lane.b32.xlu0 %v279, 32
        %v1390 = vpop.permute.xlu0 %1389
        %1391 = vrot.lane.b32.xlu0 %v280, 32
        %v1392 = vpop.permute.xlu0 %1391
        %1393 = vrot.lane.b32.xlu0 %v281, 32
        %v1394 = vpop.permute.xlu0 %1393
        %1395 = vrot.lane.b32.xlu0 %v282, 32
        %v1396 = vpop.permute.xlu0 %1395
        %1397 = vrot.lane.b32.xlu0 %v283, 32
        %v1398 = vpop.permute.xlu0 %1397
        %1399 = vrot.lane.b32.xlu0 %v284, 32
        %v1400 = vpop.permute.xlu0 %1399
        %1401 = vrot.lane.b32.xlu0 %v285, 32
        %v1402 = vpop.permute.xlu0 %1401
        %1403 = vrot.lane.b32.xlu0 %v286, 32
        %v1404 = vpop.permute.xlu0 %1403
        %1405 = vrot.lane.b32.xlu0 %v287, 32
        %v1406 = vpop.permute.xlu0 %1405
        %1407 = vrot.lane.b32.xlu0 %v288, 32
        %v1408 = vpop.permute.xlu0 %1407
        %1409 = vrot.lane.b32.xlu0 %v289, 32
        %v1410 = vpop.permute.xlu0 %1409
        %1411 = vrot.lane.b32.xlu0 %v290, 32
        %v1412 = vpop.permute.xlu0 %1411
        %1413 = vrot.lane.b32.xlu0 %v291, 32
        %v1414 = vpop.permute.xlu0 %1413
        %1415 = vrot.lane.b32.xlu0 %v292, 32
        %v1416 = vpop.permute.xlu0 %1415
        %1417 = vrot.lane.b32.xlu0 %v293, 32
        %v1418 = vpop.permute.xlu0 %1417
        %1419 = vrot.lane.b32.xlu0 %v294, 32
        %v1420 = vpop.permute.xlu0 %1419
        %1421 = vrot.lane.b32.xlu0 %v295, 32
        %v1422 = vpop.permute.xlu0 %1421
        %1423 = vrot.lane.b32.xlu0 %v296, 32
        %v1424 = vpop.permute.xlu0 %1423
        %1425 = vrot.lane.b32.xlu0 %v297, 32
        %v1426 = vpop.permute.xlu0 %1425
        %1427 = vrot.lane.b32.xlu0 %v298, 32
        %v1428 = vpop.permute.xlu0 %1427
        %1429 = vrot.lane.b32.xlu0 %v299, 32
        %v1430 = vpop.permute.xlu0 %1429
        %1431 = vrot.lane.b32.xlu0 %v300, 32
        %v1432 = vpop.permute.xlu0 %1431
        %1433 = vrot.lane.b32.xlu0 %v301, 32
        %v1434 = vpop.permute.xlu0 %1433
        %1435 = vrot.lane.b32.xlu0 %v302, 32
        %v1436 = vpop.permute.xlu0 %1435
        %1437 = vrot.lane.b32.xlu0 %v303, 32
        %v1438 = vpop.permute.xlu0 %1437
        %1439 = vrot.lane.b32.xlu0 %v304, 32
        %v1440 = vpop.permute.xlu0 %1439
        %1441 = vrot.lane.b32.xlu0 %v305, 32
        %v1442 = vpop.permute.xlu0 %1441
        %1443 = vrot.lane.b32.xlu0 %v306, 32
        %v1444 = vpop.permute.xlu0 %1443
        %1445 = vrot.lane.b32.xlu0 %v307, 32
        %v1446 = vpop.permute.xlu0 %1445
        %1447 = vrot.lane.b32.xlu0 %v308, 32
        %v1448 = vpop.permute.xlu0 %1447
        %1449 = vrot.lane.b32.xlu0 %v309, 32
        %v1450 = vpop.permute.xlu0 %1449
        %1451 = vrot.lane.b32.xlu0 %v310, 32
        %v1452 = vpop.permute.xlu0 %1451
        %1453 = vrot.lane.b32.xlu0 %v311, 32
        %v1454 = vpop.permute.xlu0 %1453
        %1455 = vrot.lane.b32.xlu0 %v312, 32
        %v1456 = vpop.permute.xlu0 %1455
        %1457 = vrot.lane.b32.xlu0 %v313, 32
        %v1458 = vpop.permute.xlu0 %1457
        %1459 = vrot.lane.b32.xlu0 %v314, 32
        %v1460 = vpop.permute.xlu0 %1459
        %1461 = vrot.lane.b32.xlu0 %v315, 32
        %v1462 = vpop.permute.xlu0 %1461
        %1463 = vrot.lane.b32.xlu0 %v316, 32
        %v1464 = vpop.permute.xlu0 %1463
        %1465 = vrot.lane.b32.xlu0 %v317, 32
        %v1466 = vpop.permute.xlu0 %1465
        %1467 = vrot.lane.b32.xlu0 %v318, 32
        %v1468 = vpop.permute.xlu0 %1467
        %1469 = vrot.lane.b32.xlu0 %v319, 32
        %v1470 = vpop.permute.xlu0 %1469
        %1471 = vrot.lane.b32.xlu0 %v320, 32
        %v1472 = vpop.permute.xlu0 %1471
        %1473 = vrot.lane.b32.xlu0 %v321, 32
        %v1474 = vpop.permute.xlu0 %1473
        %1475 = vrot.lane.b32.xlu0 %v322, 32
        %v1476 = vpop.permute.xlu0 %1475
        %1477 = vrot.lane.b32.xlu0 %v323, 32
        %v1478 = vpop.permute.xlu0 %1477
        %1479 = vrot.lane.b32.xlu0 %v324, 32
        %v1480 = vpop.permute.xlu0 %1479
        %1481 = vrot.lane.b32.xlu0 %v325, 32
        %v1482 = vpop.permute.xlu0 %1481
        %1483 = vrot.lane.b32.xlu0 %v326, 32
        %v1484 = vpop.permute.xlu0 %1483
        %1485 = vrot.lane.b32.xlu0 %v327, 32
        %v1486 = vpop.permute.xlu0 %1485
        %1487 = vrot.lane.b32.xlu0 %v328, 32
        %v1488 = vpop.permute.xlu0 %1487
        %1489 = vrot.lane.b32.xlu0 %v329, 32
        %v1490 = vpop.permute.xlu0 %1489
        %1491 = vrot.lane.b32.xlu0 %v330, 32
        %v1492 = vpop.permute.xlu0 %1491
        %1493 = vrot.lane.b32.xlu0 %v331, 32
        %v1494 = vpop.permute.xlu0 %1493
        %1495 = vrot.lane.b32.xlu0 %v332, 32
        %v1496 = vpop.permute.xlu0 %1495
        %1497 = vrot.lane.b32.xlu0 %v333, 32
        %v1498 = vpop.permute.xlu0 %1497
        %1499 = vrot.lane.b32.xlu0 %v334, 32
        %v1500 = vpop.permute.xlu0 %1499
        %1501 = vrot.lane.b32.xlu0 %v335, 32
        %v1502 = vpop.permute.xlu0 %1501
        %1503 = vrot.lane.b32.xlu0 %v336, 32
        %v1504 = vpop.permute.xlu0 %1503
        %1505 = vrot.lane.b32.xlu0 %v337, 32
        %v1506 = vpop.permute.xlu0 %1505
        %1507 = vrot.lane.b32.xlu0 %v338, 32
        %v1508 = vpop.permute.xlu0 %1507
        %1509 = vrot.lane.b32.xlu0 %v339, 32
        %v1510 = vpop.permute.xlu0 %1509
        %v1576 = vsel %vm340, %v1382, 0.0
        %1577 = vadd.xlane.f32.xlu0 %v1576
        %v1578 = vpop.xlane.xlu0 %1577
        %v1579 = vsel %vm340, %v1384, 0.0
        %1580 = vadd.xlane.f32.xlu0 %v1579
        %v1581 = vpop.xlane.xlu0 %1580
        %v1582 = vsel %vm340, %v1386, 0.0
        %1583 = vadd.xlane.f32.xlu0 %v1582
        %v1584 = vpop.xlane.xlu0 %1583
        %v1585 = vsel %vm340, %v1388, 0.0
        %1586 = vadd.xlane.f32.xlu0 %v1585
        %v1587 = vpop.xlane.xlu0 %1586
        %v1588 = vsel %vm340, %v1390, 0.0
        %1589 = vadd.xlane.f32.xlu0 %v1588
        %v1590 = vpop.xlane.xlu0 %1589
        %v1591 = vsel %vm340, %v1392, 0.0
        %1592 = vadd.xlane.f32.xlu0 %v1591
        %v1593 = vpop.xlane.xlu0 %1592
        %v1594 = vsel %vm340, %v1394, 0.0
        %1595 = vadd.xlane.f32.xlu0 %v1594
        %v1596 = vpop.xlane.xlu0 %1595
        %v1597 = vsel %vm340, %v1396, 0.0
        %1598 = vadd.xlane.f32.xlu0 %v1597
        %v1599 = vpop.xlane.xlu0 %1598
        %v1600 = vsel %vm340, %v1398, 0.0
        %1601 = vadd.xlane.f32.xlu0 %v1600
        %v1602 = vpop.xlane.xlu0 %1601
        %v1603 = vsel %vm340, %v1400, 0.0
        %1604 = vadd.xlane.f32.xlu0 %v1603
        %v1605 = vpop.xlane.xlu0 %1604
        %v1606 = vsel %vm340, %v1402, 0.0
        %1607 = vadd.xlane.f32.xlu0 %v1606
        %v1608 = vpop.xlane.xlu0 %1607
        %v1609 = vsel %vm340, %v1404, 0.0
        %1610 = vadd.xlane.f32.xlu0 %v1609
        %v1611 = vpop.xlane.xlu0 %1610
        %v1612 = vsel %vm340, %v1406, 0.0
        %1613 = vadd.xlane.f32.xlu0 %v1612
        %v1614 = vpop.xlane.xlu0 %1613
        %v1615 = vsel %vm340, %v1408, 0.0
        %1616 = vadd.xlane.f32.xlu0 %v1615
        %v1617 = vpop.xlane.xlu0 %1616
        %v1618 = vsel %vm340, %v1410, 0.0
        %1619 = vadd.xlane.f32.xlu0 %v1618
        %v1620 = vpop.xlane.xlu0 %1619
        %v1621 = vsel %vm340, %v1412, 0.0
        %1622 = vadd.xlane.f32.xlu0 %v1621
        %v1623 = vpop.xlane.xlu0 %1622
        %v1624 = vsel %vm340, %v1414, 0.0
        %1625 = vadd.xlane.f32.xlu0 %v1624
        %v1626 = vpop.xlane.xlu0 %1625
        %v1627 = vsel %vm340, %v1416, 0.0
        %1628 = vadd.xlane.f32.xlu0 %v1627
        %v1629 = vpop.xlane.xlu0 %1628
        %v1630 = vsel %vm340, %v1418, 0.0
        %1631 = vadd.xlane.f32.xlu0 %v1630
        %v1632 = vpop.xlane.xlu0 %1631
        %v1633 = vsel %vm340, %v1420, 0.0
        %1634 = vadd.xlane.f32.xlu0 %v1633
        %v1635 = vpop.xlane.xlu0 %1634
        %v1636 = vsel %vm340, %v1422, 0.0
        %1637 = vadd.xlane.f32.xlu0 %v1636
        %v1638 = vpop.xlane.xlu0 %1637
        %v1639 = vsel %vm340, %v1424, 0.0
        %1640 = vadd.xlane.f32.xlu0 %v1639
        %v1641 = vpop.xlane.xlu0 %1640
        %v1642 = vsel %vm340, %v1426, 0.0
        %1643 = vadd.xlane.f32.xlu0 %v1642
        %v1644 = vpop.xlane.xlu0 %1643
        %v1645 = vsel %vm340, %v1428, 0.0
        %1646 = vadd.xlane.f32.xlu0 %v1645
        %v1647 = vpop.xlane.xlu0 %1646
        %v1648 = vsel %vm340, %v1430, 0.0
        %1649 = vadd.xlane.f32.xlu0 %v1648
        %v1650 = vpop.xlane.xlu0 %1649
        %v1651 = vsel %vm340, %v1432, 0.0
        %1652 = vadd.xlane.f32.xlu0 %v1651
        %v1653 = vpop.xlane.xlu0 %1652
        %v1654 = vsel %vm340, %v1434, 0.0
        %1655 = vadd.xlane.f32.xlu0 %v1654
        %v1656 = vpop.xlane.xlu0 %1655
        %v1657 = vsel %vm340, %v1436, 0.0
        %1658 = vadd.xlane.f32.xlu0 %v1657
        %v1659 = vpop.xlane.xlu0 %1658
        %v1660 = vsel %vm340, %v1438, 0.0
        %1661 = vadd.xlane.f32.xlu0 %v1660
        %v1662 = vpop.xlane.xlu0 %1661
        %v1663 = vsel %vm340, %v1440, 0.0
        %1664 = vadd.xlane.f32.xlu0 %v1663
        %v1665 = vpop.xlane.xlu0 %1664
        %v1666 = vsel %vm340, %v1442, 0.0
        %1667 = vadd.xlane.f32.xlu0 %v1666
        %v1668 = vpop.xlane.xlu0 %1667
        %v1669 = vsel %vm340, %v1444, 0.0
        %1670 = vadd.xlane.f32.xlu0 %v1669
        %v1671 = vpop.xlane.xlu0 %1670
        %v1672 = vsel %vm340, %v1446, 0.0
        %1673 = vadd.xlane.f32.xlu0 %v1672
        %v1674 = vpop.xlane.xlu0 %1673
        %v1675 = vsel %vm340, %v1448, 0.0
        %1676 = vadd.xlane.f32.xlu0 %v1675
        %v1677 = vpop.xlane.xlu0 %1676
        %v1678 = vsel %vm340, %v1450, 0.0
        %1679 = vadd.xlane.f32.xlu0 %v1678
        %v1680 = vpop.xlane.xlu0 %1679
        %v1681 = vsel %vm340, %v1452, 0.0
        %1682 = vadd.xlane.f32.xlu0 %v1681
        %v1683 = vpop.xlane.xlu0 %1682
        %v1684 = vsel %vm340, %v1454, 0.0
        %1685 = vadd.xlane.f32.xlu0 %v1684
        %v1686 = vpop.xlane.xlu0 %1685
        %v1687 = vsel %vm340, %v1456, 0.0
        %1688 = vadd.xlane.f32.xlu0 %v1687
        %v1689 = vpop.xlane.xlu0 %1688
        %v1690 = vsel %vm340, %v1458, 0.0
        %1691 = vadd.xlane.f32.xlu0 %v1690
        %v1692 = vpop.xlane.xlu0 %1691
        %v1693 = vsel %vm340, %v1460, 0.0
        %1694 = vadd.xlane.f32.xlu0 %v1693
        %v1695 = vpop.xlane.xlu0 %1694
        %v1696 = vsel %vm340, %v1462, 0.0
        %1697 = vadd.xlane.f32.xlu0 %v1696
        %v1698 = vpop.xlane.xlu0 %1697
        %v1699 = vsel %vm340, %v1464, 0.0
        %1700 = vadd.xlane.f32.xlu0 %v1699
        %v1701 = vpop.xlane.xlu0 %1700
        %v1702 = vsel %vm340, %v1466, 0.0
        %1703 = vadd.xlane.f32.xlu0 %v1702
        %v1704 = vpop.xlane.xlu0 %1703
        %v1705 = vsel %vm340, %v1468, 0.0
        %1706 = vadd.xlane.f32.xlu0 %v1705
        %v1707 = vpop.xlane.xlu0 %1706
        %v1708 = vsel %vm340, %v1470, 0.0
        %1709 = vadd.xlane.f32.xlu0 %v1708
        %v1710 = vpop.xlane.xlu0 %1709
        %v1711 = vsel %vm340, %v1472, 0.0
        %1712 = vadd.xlane.f32.xlu0 %v1711
        %v1713 = vpop.xlane.xlu0 %1712
        %v1714 = vsel %vm340, %v1474, 0.0
        %1715 = vadd.xlane.f32.xlu0 %v1714
        %v1716 = vpop.xlane.xlu0 %1715
        %v1717 = vsel %vm340, %v1476, 0.0
        %1718 = vadd.xlane.f32.xlu0 %v1717
        %v1719 = vpop.xlane.xlu0 %1718
        %v1720 = vsel %vm340, %v1478, 0.0
        %1721 = vadd.xlane.f32.xlu0 %v1720
        %v1722 = vpop.xlane.xlu0 %1721
        %v1723 = vsel %vm340, %v1480, 0.0
        %1724 = vadd.xlane.f32.xlu0 %v1723
        %v1725 = vpop.xlane.xlu0 %1724
        %v1726 = vsel %vm340, %v1482, 0.0
        %1727 = vadd.xlane.f32.xlu0 %v1726
        %v1728 = vpop.xlane.xlu0 %1727
        %v1729 = vsel %vm340, %v1484, 0.0
        %1730 = vadd.xlane.f32.xlu0 %v1729
        %v1731 = vpop.xlane.xlu0 %1730
        %v1732 = vsel %vm340, %v1486, 0.0
        %1733 = vadd.xlane.f32.xlu0 %v1732
        %v1734 = vpop.xlane.xlu0 %1733
        %v1735 = vsel %vm340, %v1488, 0.0
        %1736 = vadd.xlane.f32.xlu0 %v1735
        %v1737 = vpop.xlane.xlu0 %1736
        %v1738 = vsel %vm340, %v1490, 0.0
        %1739 = vadd.xlane.f32.xlu0 %v1738
        %v1740 = vpop.xlane.xlu0 %1739
        %v1741 = vsel %vm340, %v1492, 0.0
        %1742 = vadd.xlane.f32.xlu0 %v1741
        %v1743 = vpop.xlane.xlu0 %1742
        %v1744 = vsel %vm340, %v1494, 0.0
        %1745 = vadd.xlane.f32.xlu0 %v1744
        %v1746 = vpop.xlane.xlu0 %1745
        %v1747 = vsel %vm340, %v1496, 0.0
        %1748 = vadd.xlane.f32.xlu0 %v1747
        %v1749 = vpop.xlane.xlu0 %1748
        %v1750 = vsel %vm340, %v1498, 0.0
        %1751 = vadd.xlane.f32.xlu0 %v1750
        %v1752 = vpop.xlane.xlu0 %1751
        %v1753 = vsel %vm340, %v1500, 0.0
        %1754 = vadd.xlane.f32.xlu0 %v1753
        %v1755 = vpop.xlane.xlu0 %1754
        %v1756 = vsel %vm340, %v1502, 0.0
        %1757 = vadd.xlane.f32.xlu0 %v1756
        %v1758 = vpop.xlane.xlu0 %1757
        %v1759 = vsel %vm340, %v1504, 0.0
        %1760 = vadd.xlane.f32.xlu0 %v1759
        %v1761 = vpop.xlane.xlu0 %1760
        %v1762 = vsel %vm340, %v1506, 0.0
        %1763 = vadd.xlane.f32.xlu0 %v1762
        %v1764 = vpop.xlane.xlu0 %1763
        %v1765 = vsel %vm340, %v1508, 0.0
        %1766 = vadd.xlane.f32.xlu0 %v1765
        %v1767 = vpop.xlane.xlu0 %1766
        %v1768 = vsel %vm340, %v1510, 0.0
        %1769 = vadd.xlane.f32.xlu0 %v1768
        %v1770 = vpop.xlane.xlu0 %1769
        %vm1771 = vcmask 7168
        %v1772 = vsel %vm1771, %v343, %v798
        %v1773 = vsel %vm1771, %v346, %v801
        %v1774 = vsel %vm1771, %v349, %v804
        %v1775 = vsel %vm1771, %v352, %v807
        %v1776 = vsel %vm1771, %v355, %v810
        %v1777 = vsel %vm1771, %v358, %v813
        %v1778 = vsel %vm1771, %v361, %v816
        %v1779 = vsel %vm1771, %v364, %v819
        %v1780 = vsel %vm1771, %v367, %v822
        %v1781 = vsel %vm1771, %v370, %v825
        %v1782 = vsel %vm1771, %v373, %v828
        %v1783 = vsel %vm1771, %v376, %v831
        %v1784 = vsel %vm1771, %v379, %v834
        %v1785 = vsel %vm1771, %v382, %v837
        %v1786 = vsel %vm1771, %v385, %v840
        %v1787 = vsel %vm1771, %v388, %v843
        %v1788 = vsel %vm1771, %v391, %v846
        %v1789 = vsel %vm1771, %v394, %v849
        %v1790 = vsel %vm1771, %v397, %v852
        %v1791 = vsel %vm1771, %v400, %v855
        %v1792 = vsel %vm1771, %v403, %v858
        %v1793 = vsel %vm1771, %v406, %v861
        %v1794 = vsel %vm1771, %v409, %v864
        %v1795 = vsel %vm1771, %v412, %v867
        %v1796 = vsel %vm1771, %v415, %v870
        %v1797 = vsel %vm1771, %v418, %v873
        %v1798 = vsel %vm1771, %v421, %v876
        %v1799 = vsel %vm1771, %v424, %v879
        %v1800 = vsel %vm1771, %v427, %v882
        %v1801 = vsel %vm1771, %v430, %v885
        %v1802 = vsel %vm1771, %v433, %v888
        %v1803 = vsel %vm1771, %v436, %v891
        %v1804 = vsel %vm1771, %v439, %v894
        %v1805 = vsel %vm1771, %v442, %v897
        %v1806 = vsel %vm1771, %v445, %v900
        %v1807 = vsel %vm1771, %v448, %v903
        %v1808 = vsel %vm1771, %v451, %v906
        %v1809 = vsel %vm1771, %v454, %v909
        %v1810 = vsel %vm1771, %v457, %v912
        %v1811 = vsel %vm1771, %v460, %v915
        %v1812 = vsel %vm1771, %v463, %v918
        %v1813 = vsel %vm1771, %v466, %v921
        %v1814 = vsel %vm1771, %v469, %v924
        %v1815 = vsel %vm1771, %v472, %v927
        %v1816 = vsel %vm1771, %v475, %v930
        %v1817 = vsel %vm1771, %v478, %v933
        %v1818 = vsel %vm1771, %v481, %v936
        %v1819 = vsel %vm1771, %v484, %v939
        %v1820 = vsel %vm1771, %v487, %v942
        %v1821 = vsel %vm1771, %v490, %v945
        %v1822 = vsel %vm1771, %v493, %v948
        %v1823 = vsel %vm1771, %v496, %v951
        %v1824 = vsel %vm1771, %v499, %v954
        %v1825 = vsel %vm1771, %v502, %v957
        %v1826 = vsel %vm1771, %v505, %v960
        %v1827 = vsel %vm1771, %v508, %v963
        %v1828 = vsel %vm1771, %v511, %v966
        %v1829 = vsel %vm1771, %v514, %v969
        %v1830 = vsel %vm1771, %v517, %v972
        %v1831 = vsel %vm1771, %v520, %v975
        %v1832 = vsel %vm1771, %v523, %v978
        %v1833 = vsel %vm1771, %v526, %v981
        %v1834 = vsel %vm1771, %v529, %v984
        %v1835 = vsel %vm1771, %v532, %v987
        %v1836 = vsel %vm1771, %v535, %v990
        %vm1837 = vcmask 15360
        %v1838 = vsel %vm1837, %v1772, %v1188
        %v1839 = vsel %vm1837, %v1773, %v1191
        %v1840 = vsel %vm1837, %v1774, %v1194
        %v1841 = vsel %vm1837, %v1775, %v1197
        %v1842 = vsel %vm1837, %v1776, %v1200
        %v1843 = vsel %vm1837, %v1777, %v1203
        %v1844 = vsel %vm1837, %v1778, %v1206
        %v1845 = vsel %vm1837, %v1779, %v1209
        %v1846 = vsel %vm1837, %v1780, %v1212
        %v1847 = vsel %vm1837, %v1781, %v1215
        %v1848 = vsel %vm1837, %v1782, %v1218
        %v1849 = vsel %vm1837, %v1783, %v1221
        %v1850 = vsel %vm1837, %v1784, %v1224
        %v1851 = vsel %vm1837, %v1785, %v1227
        %v1852 = vsel %vm1837, %v1786, %v1230
        %v1853 = vsel %vm1837, %v1787, %v1233
        %v1854 = vsel %vm1837, %v1788, %v1236
        %v1855 = vsel %vm1837, %v1789, %v1239
        %v1856 = vsel %vm1837, %v1790, %v1242
        %v1857 = vsel %vm1837, %v1791, %v1245
        %v1858 = vsel %vm1837, %v1792, %v1248
        %v1859 = vsel %vm1837, %v1793, %v1251
        %v1860 = vsel %vm1837, %v1794, %v1254
        %v1861 = vsel %vm1837, %v1795, %v1257
        %v1862 = vsel %vm1837, %v1796, %v1260
        %v1863 = vsel %vm1837, %v1797, %v1263
        %v1864 = vsel %vm1837, %v1798, %v1266
        %v1865 = vsel %vm1837, %v1799, %v1269
        %v1866 = vsel %vm1837, %v1800, %v1272
        %v1867 = vsel %vm1837, %v1801, %v1275
        %v1868 = vsel %vm1837, %v1802, %v1278
        %v1869 = vsel %vm1837, %v1803, %v1281
        %v1870 = vsel %vm1837, %v1804, %v1284
        %v1871 = vsel %vm1837, %v1805, %v1287
        %v1872 = vsel %vm1837, %v1806, %v1290
        %v1873 = vsel %vm1837, %v1807, %v1293
        %v1874 = vsel %vm1837, %v1808, %v1296
        %v1875 = vsel %vm1837, %v1809, %v1299
        %v1876 = vsel %vm1837, %v1810, %v1302
        %v1877 = vsel %vm1837, %v1811, %v1305
        %v1878 = vsel %vm1837, %v1812, %v1308
        %v1879 = vsel %vm1837, %v1813, %v1311
        %v1880 = vsel %vm1837, %v1814, %v1314
        %v1881 = vsel %vm1837, %v1815, %v1317
        %v1882 = vsel %vm1837, %v1816, %v1320
        %v1883 = vsel %vm1837, %v1817, %v1323
        %v1884 = vsel %vm1837, %v1818, %v1326
        %v1885 = vsel %vm1837, %v1819, %v1329
        %v1886 = vsel %vm1837, %v1820, %v1332
        %v1887 = vsel %vm1837, %v1821, %v1335
        %v1888 = vsel %vm1837, %v1822, %v1338
        %v1889 = vsel %vm1837, %v1823, %v1341
        %v1890 = vsel %vm1837, %v1824, %v1344
        %v1891 = vsel %vm1837, %v1825, %v1347
        %v1892 = vsel %vm1837, %v1826, %v1350
        %v1893 = vsel %vm1837, %v1827, %v1353
        %v1894 = vsel %vm1837, %v1828, %v1356
        %v1895 = vsel %vm1837, %v1829, %v1359
        %v1896 = vsel %vm1837, %v1830, %v1362
        %v1897 = vsel %vm1837, %v1831, %v1365
        %v1898 = vsel %vm1837, %v1832, %v1368
        %v1899 = vsel %vm1837, %v1833, %v1371
        %v1900 = vsel %vm1837, %v1834, %v1374
        %v1901 = vsel %vm1837, %v1835, %v1377
        %v1902 = vsel %vm1837, %v1836, %v1380
        %vm1903 = vcmask 23552
        %v1904 = vsel %vm1903, %v1838, %v1578
        %v1905 = vsel %vm1903, %v1839, %v1581
        %v1906 = vsel %vm1903, %v1840, %v1584
        %v1907 = vsel %vm1903, %v1841, %v1587
        %v1908 = vsel %vm1903, %v1842, %v1590
        %v1909 = vsel %vm1903, %v1843, %v1593
        %v1910 = vsel %vm1903, %v1844, %v1596
        %v1911 = vsel %vm1903, %v1845, %v1599
        %v1912 = vsel %vm1903, %v1846, %v1602
        %v1913 = vsel %vm1903, %v1847, %v1605
        %v1914 = vsel %vm1903, %v1848, %v1608
        %v1915 = vsel %vm1903, %v1849, %v1611
        %v1916 = vsel %vm1903, %v1850, %v1614
        %v1917 = vsel %vm1903, %v1851, %v1617
        %v1918 = vsel %vm1903, %v1852, %v1620
        %v1919 = vsel %vm1903, %v1853, %v1623
        %v1920 = vsel %vm1903, %v1854, %v1626
        %v1921 = vsel %vm1903, %v1855, %v1629
        %v1922 = vsel %vm1903, %v1856, %v1632
        %v1923 = vsel %vm1903, %v1857, %v1635
        %v1924 = vsel %vm1903, %v1858, %v1638
        %v1925 = vsel %vm1903, %v1859, %v1641
        %v1926 = vsel %vm1903, %v1860, %v1644
        %v1927 = vsel %vm1903, %v1861, %v1647
        %v1928 = vsel %vm1903, %v1862, %v1650
        %v1929 = vsel %vm1903, %v1863, %v1653
        %v1930 = vsel %vm1903, %v1864, %v1656
        %v1931 = vsel %vm1903, %v1865, %v1659
        %v1932 = vsel %vm1903, %v1866, %v1662
        %v1933 = vsel %vm1903, %v1867, %v1665
        %v1934 = vsel %vm1903, %v1868, %v1668
        %v1935 = vsel %vm1903, %v1869, %v1671
        %v1936 = vsel %vm1903, %v1870, %v1674
        %v1937 = vsel %vm1903, %v1871, %v1677
        %v1938 = vsel %vm1903, %v1872, %v1680
        %v1939 = vsel %vm1903, %v1873, %v1683
        %v1940 = vsel %vm1903, %v1874, %v1686
        %v1941 = vsel %vm1903, %v1875, %v1689
        %v1942 = vsel %vm1903, %v1876, %v1692
        %v1943 = vsel %vm1903, %v1877, %v1695
        %v1944 = vsel %vm1903, %v1878, %v1698
        %v1945 = vsel %vm1903, %v1879, %v1701
        %v1946 = vsel %vm1903, %v1880, %v1704
        %v1947 = vsel %vm1903, %v1881, %v1707
        %v1948 = vsel %vm1903, %v1882, %v1710
        %v1949 = vsel %vm1903, %v1883, %v1713
        %v1950 = vsel %vm1903, %v1884, %v1716
        %v1951 = vsel %vm1903, %v1885, %v1719
        %v1952 = vsel %vm1903, %v1886, %v1722
        %v1953 = vsel %vm1903, %v1887, %v1725
        %v1954 = vsel %vm1903, %v1888, %v1728
        %v1955 = vsel %vm1903, %v1889, %v1731
        %v1956 = vsel %vm1903, %v1890, %v1734
        %v1957 = vsel %vm1903, %v1891, %v1737
        %v1958 = vsel %vm1903, %v1892, %v1740
        %v1959 = vsel %vm1903, %v1893, %v1743
        %v1960 = vsel %vm1903, %v1894, %v1746
        %v1961 = vsel %vm1903, %v1895, %v1749
        %v1962 = vsel %vm1903, %v1896, %v1752
        %v1963 = vsel %vm1903, %v1897, %v1755
        %v1964 = vsel %vm1903, %v1898, %v1758
        %v1965 = vsel %vm1903, %v1899, %v1761
        %v1966 = vsel %vm1903, %v1900, %v1764
        %v1967 = vsel %vm1903, %v1901, %v1767
        %v1968 = vsel %vm1903, %v1902, %v1770
        %v1969 = vstv %s268
        %v1970 = vadd.f32 %v1904, %v1969
        %v1971 = vadd.f32 %v1905, %v1969
        %v1972 = vadd.f32 %v1906, %v1969
        %v1973 = vadd.f32 %v1907, %v1969
        %v1974 = vadd.f32 %v1908, %v1969
        %v1975 = vadd.f32 %v1909, %v1969
        %v1976 = vadd.f32 %v1910, %v1969
        %v1977 = vadd.f32 %v1911, %v1969
        %v1978 = vadd.f32 %v1912, %v1969
        %v1979 = vadd.f32 %v1913, %v1969
        %v1980 = vadd.f32 %v1914, %v1969
        %v1981 = vadd.f32 %v1915, %v1969
        %v1982 = vadd.f32 %v1916, %v1969
        %v1983 = vadd.f32 %v1917, %v1969
        %v1984 = vadd.f32 %v1918, %v1969
        %v1985 = vadd.f32 %v1919, %v1969
        %v1986 = vadd.f32 %v1920, %v1969
        %v1987 = vadd.f32 %v1921, %v1969
        %v1988 = vadd.f32 %v1922, %v1969
        %v1989 = vadd.f32 %v1923, %v1969
        %v1990 = vadd.f32 %v1924, %v1969
        %v1991 = vadd.f32 %v1925, %v1969
        %v1992 = vadd.f32 %v1926, %v1969
        %v1993 = vadd.f32 %v1927, %v1969
        %v1994 = vadd.f32 %v1928, %v1969
        %v1995 = vadd.f32 %v1929, %v1969
        %v1996 = vadd.f32 %v1930, %v1969
        %v1997 = vadd.f32 %v1931, %v1969
        %v1998 = vadd.f32 %v1932, %v1969
        %v1999 = vadd.f32 %v1933, %v1969
        %v2000 = vadd.f32 %v1934, %v1969
        %v2001 = vadd.f32 %v1935, %v1969
        %v2002 = vadd.f32 %v1936, %v1969
        %v2003 = vadd.f32 %v1937, %v1969
        %v2004 = vadd.f32 %v1938, %v1969
        %v2005 = vadd.f32 %v1939, %v1969
        %v2006 = vadd.f32 %v1940, %v1969
        %v2007 = vadd.f32 %v1941, %v1969
        %v2008 = vadd.f32 %v1942, %v1969
        %v2009 = vadd.f32 %v1943, %v1969
        %v2010 = vadd.f32 %v1944, %v1969
        %v2011 = vadd.f32 %v1945, %v1969
        %v2012 = vadd.f32 %v1946, %v1969
        %v2013 = vadd.f32 %v1947, %v1969
        %v2014 = vadd.f32 %v1948, %v1969
        %v2015 = vadd.f32 %v1949, %v1969
        %v2016 = vadd.f32 %v1950, %v1969
        %v2017 = vadd.f32 %v1951, %v1969
        %v2018 = vadd.f32 %v1952, %v1969
        %v2019 = vadd.f32 %v1953, %v1969
        %v2020 = vadd.f32 %v1954, %v1969
        %v2021 = vadd.f32 %v1955, %v1969
        %v2022 = vadd.f32 %v1956, %v1969
        %v2023 = vadd.f32 %v1957, %v1969
        %v2024 = vadd.f32 %v1958, %v1969
        %v2025 = vadd.f32 %v1959, %v1969
        %v2026 = vadd.f32 %v1960, %v1969
        %v2027 = vadd.f32 %v1961, %v1969
        %v2028 = vadd.f32 %v1962, %v1969
        %v2029 = vadd.f32 %v1963, %v1969
        %v2030 = vadd.f32 %v1964, %v1969
        %v2031 = vadd.f32 %v1965, %v1969
        %v2032 = vadd.f32 %v1966, %v1969
        %v2033 = vadd.f32 %v1967, %v1969
        %v2034 = vadd.f32 %v1968, %v1969
        %vm2035 = vcmask 31744
        %2036 = vst.msk [vmem:[%s191] sm:$0xff] %vm2035, %v1970
        %2037 = vst.msk [vmem:[%s191 + $0x8] sm:$0xff] %vm2035, %v1971
        %2038 = vst.msk [vmem:[%s191 + $0x10] sm:$0xff] %vm2035, %v1972
        %2039 = vst.msk [vmem:[%s191 + $0x18] sm:$0xff] %vm2035, %v1973
        %2040 = vst.msk [vmem:[%s191 + $0x20] sm:$0xff] %vm2035, %v1974
        %2041 = vst.msk [vmem:[%s191 + $0x28] sm:$0xff] %vm2035, %v1975
        %2042 = vst.msk [vmem:[%s191 + $0x30] sm:$0xff] %vm2035, %v1976
        %2043 = vst.msk [vmem:[%s191 + $0x38] sm:$0xff] %vm2035, %v1977
        %2044 = vst.msk [vmem:[%s191 + $0x40] sm:$0xff] %vm2035, %v1978
        %2045 = vst.msk [vmem:[%s191 + $0x48] sm:$0xff] %vm2035, %v1979
        %2046 = vst.msk [vmem:[%s191 + $0x50] sm:$0xff] %vm2035, %v1980
        %2047 = vst.msk [vmem:[%s191 + $0x58] sm:$0xff] %vm2035, %v1981
        %2048 = vst.msk [vmem:[%s191 + $0x60] sm:$0xff] %vm2035, %v1982
        %2049 = vst.msk [vmem:[%s191 + $0x68] sm:$0xff] %vm2035, %v1983
        %2050 = vst.msk [vmem:[%s191 + $0x70] sm:$0xff] %vm2035, %v1984
        %2051 = vst.msk [vmem:[%s191 + $0x78] sm:$0xff] %vm2035, %v1985
        %2052 = vst.msk [vmem:[%s191 + $0x80] sm:$0xff] %vm2035, %v1986
        %2053 = vst.msk [vmem:[%s191 + $0x88] sm:$0xff] %vm2035, %v1987
        %2054 = vst.msk [vmem:[%s191 + $0x90] sm:$0xff] %vm2035, %v1988
        %2055 = vst.msk [vmem:[%s191 + $0x98] sm:$0xff] %vm2035, %v1989
        %2056 = vst.msk [vmem:[%s191 + $0xa0] sm:$0xff] %vm2035, %v1990
        %2057 = vst.msk [vmem:[%s191 + $0xa8] sm:$0xff] %vm2035, %v1991
        %2058 = vst.msk [vmem:[%s191 + $0xb0] sm:$0xff] %vm2035, %v1992
        %2059 = vst.msk [vmem:[%s191 + $0xb8] sm:$0xff] %vm2035, %v1993
        %2060 = vst.msk [vmem:[%s191 + $0xc0] sm:$0xff] %vm2035, %v1994
        %2061 = vst.msk [vmem:[%s191 + $0xc8] sm:$0xff] %vm2035, %v1995
        %2062 = vst.msk [vmem:[%s191 + $0xd0] sm:$0xff] %vm2035, %v1996
        %2063 = vst.msk [vmem:[%s191 + $0xd8] sm:$0xff] %vm2035, %v1997
        %2064 = vst.msk [vmem:[%s191 + $0xe0] sm:$0xff] %vm2035, %v1998
        %2065 = vst.msk [vmem:[%s191 + $0xe8] sm:$0xff] %vm2035, %v1999
        %2066 = vst.msk [vmem:[%s191 + $0xf0] sm:$0xff] %vm2035, %v2000
        %2067 = vst.msk [vmem:[%s191 + $0xf8] sm:$0xff] %vm2035, %v2001
        %2068 = vst.msk [vmem:[%s191 + $0x100] sm:$0xff] %vm2035, %v2002
        %2069 = vst.msk [vmem:[%s191 + $0x108] sm:$0xff] %vm2035, %v2003
        %2070 = vst.msk [vmem:[%s191 + $0x110] sm:$0xff] %vm2035, %v2004
        %2071 = vst.msk [vmem:[%s191 + $0x118] sm:$0xff] %vm2035, %v2005
        %2072 = vst.msk [vmem:[%s191 + $0x120] sm:$0xff] %vm2035, %v2006
        %2073 = vst.msk [vmem:[%s191 + $0x128] sm:$0xff] %vm2035, %v2007
        %2074 = vst.msk [vmem:[%s191 + $0x130] sm:$0xff] %vm2035, %v2008
        %2075 = vst.msk [vmem:[%s191 + $0x138] sm:$0xff] %vm2035, %v2009
        %2076 = vst.msk [vmem:[%s191 + $0x140] sm:$0xff] %vm2035, %v2010
        %2077 = vst.msk [vmem:[%s191 + $0x148] sm:$0xff] %vm2035, %v2011
        %2078 = vst.msk [vmem:[%s191 + $0x150] sm:$0xff] %vm2035, %v2012
        %2079 = vst.msk [vmem:[%s191 + $0x158] sm:$0xff] %vm2035, %v2013
        %2080 = vst.msk [vmem:[%s191 + $0x160] sm:$0xff] %vm2035, %v2014
        %2081 = vst.msk [vmem:[%s191 + $0x168] sm:$0xff] %vm2035, %v2015
        %2082 = vst.msk [vmem:[%s191 + $0x170] sm:$0xff] %vm2035, %v2016
        %2083 = vst.msk [vmem:[%s191 + $0x178] sm:$0xff] %vm2035, %v2017
        %2084 = vst.msk [vmem:[%s191 + $0x180] sm:$0xff] %vm2035, %v2018
        %2085 = vst.msk [vmem:[%s191 + $0x188] sm:$0xff] %vm2035, %v2019
        %2086 = vst.msk [vmem:[%s191 + $0x190] sm:$0xff] %vm2035, %v2020
        %2087 = vst.msk [vmem:[%s191 + $0x198] sm:$0xff] %vm2035, %v2021
        %2088 = vst.msk [vmem:[%s191 + $0x1a0] sm:$0xff] %vm2035, %v2022
        %2089 = vst.msk [vmem:[%s191 + $0x1a8] sm:$0xff] %vm2035, %v2023
        %2090 = vst.msk [vmem:[%s191 + $0x1b0] sm:$0xff] %vm2035, %v2024
        %2091 = vst.msk [vmem:[%s191 + $0x1b8] sm:$0xff] %vm2035, %v2025
        %2092 = vst.msk [vmem:[%s191 + $0x1c0] sm:$0xff] %vm2035, %v2026
        %2093 = vst.msk [vmem:[%s191 + $0x1c8] sm:$0xff] %vm2035, %v2027
        %2094 = vst.msk [vmem:[%s191 + $0x1d0] sm:$0xff] %vm2035, %v2028
        %2095 = vst.msk [vmem:[%s191 + $0x1d8] sm:$0xff] %vm2035, %v2029
        %2096 = vst.msk [vmem:[%s191 + $0x1e0] sm:$0xff] %vm2035, %v2030
        %2097 = vst.msk [vmem:[%s191 + $0x1e8] sm:$0xff] %vm2035, %v2031
        %2098 = vst.msk [vmem:[%s191 + $0x1f0] sm:$0xff] %vm2035, %v2032
        %2099 = vst.msk [vmem:[%s191 + $0x1f8] sm:$0xff] %vm2035, %v2033
        %2100 = vst.msk [vmem:[%s191 + $0x200] sm:$0xff] %vm2035, %v2034
        %s2101 = sand.u32 %s94, 1
        %s2102 = sand.u32 %s94, 1
        %s2103 = smul.addr %s2102, 520
        %s2104 = scalar_lea.vmem [#allocation5], %s2103
        // Predicated region
        $region37: #{tpu_custom_call.1} parent=31 // pred_check
          %p2105 = pneg %p104
        $region38: #{tpu_custom_call.1} parent=31 // pred_check_branch
          %2107 = sbr.rel (%p2105) target = $region40
        $region39: #{tpu_custom_call.1} parent=31 // pred_region
          %s2108 = smul.u32 65, %s18
          %s2109 = ssub.s32 129, %s2108
          %p2110 = scmp.lt.s32.totalorder %s2109, 65
          %s2111 = scalar_select %p2110, %s2109, 65
          %s2112 = smul.u32 128, %s2111
          %p2113 = scmp.ne.s32.totalorder 0, %s2112
          %s2114 = smul.addr %s2108, 8
          %s2115 = scalar_lea.vmem %s3, %s2114
          // Predicated region
          $region41: #{tpu_custom_call.1} parent=39 // pred_check
            %p2116 = pneg %p2113
          $region42: #{tpu_custom_call.1} parent=39 // pred_check_branch
            %2118 = sbr.rel (%p2116) target = $region44
          $region43: #{tpu_custom_call.1} parent=39 // pred_region
            // Predicated region
            $region45: #{tpu_custom_call.1} parent=43 // pred_check
              _
            $region46: #{tpu_custom_call.1} parent=43 // pred_check_branch
              %2120 = sbr.rel (0) target = $region48
            $region47: #{tpu_custom_call.1} parent=43 // pred_region
              // Predicated region
              $region67: #{tpu_custom_call.1} parent=47 // pred_check
                _
              $region68: #{tpu_custom_call.1} parent=47 // pred_check_branch
                %2296 = sbr.rel (0) target = $region70
              $region69: #{tpu_custom_call.1} parent=47 // pred_region
                %s2297 = sshrl.u32 %s2111, 6
                // While loop
                $region71: #{tpu_custom_call.1} parent=69 // loop_pre_header
                  _
                $region72: #{tpu_custom_call.1} parent=69 // loop_header
                  %s2299 = sphi 0, %s2301
                  %p2300 = scmp.ge.s32.totalorder %s2299, %s2297
                  %s2304 = sphi 0, %s2437
                  %s2305 = sphi %s2104, %s2440
                  %s2306 = sphi %s2115, %s2441
                $region73: #{tpu_custom_call.1} parent=69 // loop_header_branch
                  %2303 = sbr.rel (%p2300) target = $region77
                $region74: #{tpu_custom_call.1} parent=69 // loop_body
                  %v2307 = vld [vmem:[%s2305] sm:$0xff]
                  %2308 = vst [vmem:[%s2306] sm:$0xff] %v2307
                  %v2309 = vld [vmem:[%s2305 + $0x8] sm:$0xff]
                  %2310 = vst [vmem:[%s2306 + $0x8] sm:$0xff] %v2309
                  %v2311 = vld [vmem:[%s2305 + $0x10] sm:$0xff]
                  %2312 = vst [vmem:[%s2306 + $0x10] sm:$0xff] %v2311
                  %v2313 = vld [vmem:[%s2305 + $0x18] sm:$0xff]
                  %2314 = vst [vmem:[%s2306 + $0x18] sm:$0xff] %v2313
                  %v2315 = vld [vmem:[%s2305 + $0x20] sm:$0xff]
                  %2316 = vst [vmem:[%s2306 + $0x20] sm:$0xff] %v2315
                  %v2317 = vld [vmem:[%s2305 + $0x28] sm:$0xff]
                  %2318 = vst [vmem:[%s2306 + $0x28] sm:$0xff] %v2317
                  %v2319 = vld [vmem:[%s2305 + $0x30] sm:$0xff]
                  %2320 = vst [vmem:[%s2306 + $0x30] sm:$0xff] %v2319
                  %v2321 = vld [vmem:[%s2305 + $0x38] sm:$0xff]
                  %2322 = vst [vmem:[%s2306 + $0x38] sm:$0xff] %v2321
                  %v2323 = vld [vmem:[%s2305 + $0x40] sm:$0xff]
                  %2324 = vst [vmem:[%s2306 + $0x40] sm:$0xff] %v2323
                  %v2325 = vld [vmem:[%s2305 + $0x48] sm:$0xff]
                  %2326 = vst [vmem:[%s2306 + $0x48] sm:$0xff] %v2325
                  %v2327 = vld [vmem:[%s2305 + $0x50] sm:$0xff]
                  %2328 = vst [vmem:[%s2306 + $0x50] sm:$0xff] %v2327
                  %v2329 = vld [vmem:[%s2305 + $0x58] sm:$0xff]
                  %2330 = vst [vmem:[%s2306 + $0x58] sm:$0xff] %v2329
                  %v2331 = vld [vmem:[%s2305 + $0x60] sm:$0xff]
                  %2332 = vst [vmem:[%s2306 + $0x60] sm:$0xff] %v2331
                  %v2333 = vld [vmem:[%s2305 + $0x68] sm:$0xff]
                  %2334 = vst [vmem:[%s2306 + $0x68] sm:$0xff] %v2333
                  %v2335 = vld [vmem:[%s2305 + $0x70] sm:$0xff]
                  %2336 = vst [vmem:[%s2306 + $0x70] sm:$0xff] %v2335
                  %v2337 = vld [vmem:[%s2305 + $0x78] sm:$0xff]
                  %2338 = vst [vmem:[%s2306 + $0x78] sm:$0xff] %v2337
                  %v2339 = vld [vmem:[%s2305 + $0x80] sm:$0xff]
                  %2340 = vst [vmem:[%s2306 + $0x80] sm:$0xff] %v2339
                  %v2341 = vld [vmem:[%s2305 + $0x88] sm:$0xff]
                  %2342 = vst [vmem:[%s2306 + $0x88] sm:$0xff] %v2341
                  %v2343 = vld [vmem:[%s2305 + $0x90] sm:$0xff]
                  %2344 = vst [vmem:[%s2306 + $0x90] sm:$0xff] %v2343
                  %v2345 = vld [vmem:[%s2305 + $0x98] sm:$0xff]
                  %2346 = vst [vmem:[%s2306 + $0x98] sm:$0xff] %v2345
                  %v2347 = vld [vmem:[%s2305 + $0xa0] sm:$0xff]
                  %2348 = vst [vmem:[%s2306 + $0xa0] sm:$0xff] %v2347
                  %v2349 = vld [vmem:[%s2305 + $0xa8] sm:$0xff]
                  %2350 = vst [vmem:[%s2306 + $0xa8] sm:$0xff] %v2349
                  %v2351 = vld [vmem:[%s2305 + $0xb0] sm:$0xff]
                  %2352 = vst [vmem:[%s2306 + $0xb0] sm:$0xff] %v2351
                  %v2353 = vld [vmem:[%s2305 + $0xb8] sm:$0xff]
                  %2354 = vst [vmem:[%s2306 + $0xb8] sm:$0xff] %v2353
                  %v2355 = vld [vmem:[%s2305 + $0xc0] sm:$0xff]
                  %2356 = vst [vmem:[%s2306 + $0xc0] sm:$0xff] %v2355
                  %v2357 = vld [vmem:[%s2305 + $0xc8] sm:$0xff]
                  %2358 = vst [vmem:[%s2306 + $0xc8] sm:$0xff] %v2357
                  %v2359 = vld [vmem:[%s2305 + $0xd0] sm:$0xff]
                  %2360 = vst [vmem:[%s2306 + $0xd0] sm:$0xff] %v2359
                  %v2361 = vld [vmem:[%s2305 + $0xd8] sm:$0xff]
                  %2362 = vst [vmem:[%s2306 + $0xd8] sm:$0xff] %v2361
                  %v2363 = vld [vmem:[%s2305 + $0xe0] sm:$0xff]
                  %2364 = vst [vmem:[%s2306 + $0xe0] sm:$0xff] %v2363
                  %v2365 = vld [vmem:[%s2305 + $0xe8] sm:$0xff]
                  %2366 = vst [vmem:[%s2306 + $0xe8] sm:$0xff] %v2365
                  %v2367 = vld [vmem:[%s2305 + $0xf0] sm:$0xff]
                  %2368 = vst [vmem:[%s2306 + $0xf0] sm:$0xff] %v2367
                  %v2369 = vld [vmem:[%s2305 + $0xf8] sm:$0xff]
                  %2370 = vst [vmem:[%s2306 + $0xf8] sm:$0xff] %v2369
                  %v2371 = vld [vmem:[%s2305 + $0x100] sm:$0xff]
                  %2372 = vst [vmem:[%s2306 + $0x100] sm:$0xff] %v2371
                  %v2373 = vld [vmem:[%s2305 + $0x108] sm:$0xff]
                  %2374 = vst [vmem:[%s2306 + $0x108] sm:$0xff] %v2373
                  %v2375 = vld [vmem:[%s2305 + $0x110] sm:$0xff]
                  %2376 = vst [vmem:[%s2306 + $0x110] sm:$0xff] %v2375
                  %v2377 = vld [vmem:[%s2305 + $0x118] sm:$0xff]
                  %2378 = vst [vmem:[%s2306 + $0x118] sm:$0xff] %v2377
                  %v2379 = vld [vmem:[%s2305 + $0x120] sm:$0xff]
                  %2380 = vst [vmem:[%s2306 + $0x120] sm:$0xff] %v2379
                  %v2381 = vld [vmem:[%s2305 + $0x128] sm:$0xff]
                  %2382 = vst [vmem:[%s2306 + $0x128] sm:$0xff] %v2381
                  %v2383 = vld [vmem:[%s2305 + $0x130] sm:$0xff]
                  %2384 = vst [vmem:[%s2306 + $0x130] sm:$0xff] %v2383
                  %v2385 = vld [vmem:[%s2305 + $0x138] sm:$0xff]
                  %2386 = vst [vmem:[%s2306 + $0x138] sm:$0xff] %v2385
                  %v2387 = vld [vmem:[%s2305 + $0x140] sm:$0xff]
                  %2388 = vst [vmem:[%s2306 + $0x140] sm:$0xff] %v2387
                  %v2389 = vld [vmem:[%s2305 + $0x148] sm:$0xff]
                  %2390 = vst [vmem:[%s2306 + $0x148] sm:$0xff] %v2389
                  %v2391 = vld [vmem:[%s2305 + $0x150] sm:$0xff]
                  %2392 = vst [vmem:[%s2306 + $0x150] sm:$0xff] %v2391
                  %v2393 = vld [vmem:[%s2305 + $0x158] sm:$0xff]
                  %2394 = vst [vmem:[%s2306 + $0x158] sm:$0xff] %v2393
                  %v2395 = vld [vmem:[%s2305 + $0x160] sm:$0xff]
                  %2396 = vst [vmem:[%s2306 + $0x160] sm:$0xff] %v2395
                  %v2397 = vld [vmem:[%s2305 + $0x168] sm:$0xff]
                  %2398 = vst [vmem:[%s2306 + $0x168] sm:$0xff] %v2397
                  %v2399 = vld [vmem:[%s2305 + $0x170] sm:$0xff]
                  %2400 = vst [vmem:[%s2306 + $0x170] sm:$0xff] %v2399
                  %v2401 = vld [vmem:[%s2305 + $0x178] sm:$0xff]
                  %2402 = vst [vmem:[%s2306 + $0x178] sm:$0xff] %v2401
                  %v2403 = vld [vmem:[%s2305 + $0x180] sm:$0xff]
                  %2404 = vst [vmem:[%s2306 + $0x180] sm:$0xff] %v2403
                  %v2405 = vld [vmem:[%s2305 + $0x188] sm:$0xff]
                  %2406 = vst [vmem:[%s2306 + $0x188] sm:$0xff] %v2405
                  %v2407 = vld [vmem:[%s2305 + $0x190] sm:$0xff]
                  %2408 = vst [vmem:[%s2306 + $0x190] sm:$0xff] %v2407
                  %v2409 = vld [vmem:[%s2305 + $0x198] sm:$0xff]
                  %2410 = vst [vmem:[%s2306 + $0x198] sm:$0xff] %v2409
                  %v2411 = vld [vmem:[%s2305 + $0x1a0] sm:$0xff]
                  %2412 = vst [vmem:[%s2306 + $0x1a0] sm:$0xff] %v2411
                  %v2413 = vld [vmem:[%s2305 + $0x1a8] sm:$0xff]
                  %2414 = vst [vmem:[%s2306 + $0x1a8] sm:$0xff] %v2413
                  %v2415 = vld [vmem:[%s2305 + $0x1b0] sm:$0xff]
                  %2416 = vst [vmem:[%s2306 + $0x1b0] sm:$0xff] %v2415
                  %v2417 = vld [vmem:[%s2305 + $0x1b8] sm:$0xff]
                  %2418 = vst [vmem:[%s2306 + $0x1b8] sm:$0xff] %v2417
                  %v2419 = vld [vmem:[%s2305 + $0x1c0] sm:$0xff]
                  %2420 = vst [vmem:[%s2306 + $0x1c0] sm:$0xff] %v2419
                  %v2421 = vld [vmem:[%s2305 + $0x1c8] sm:$0xff]
                  %2422 = vst [vmem:[%s2306 + $0x1c8] sm:$0xff] %v2421
                  %v2423 = vld [vmem:[%s2305 + $0x1d0] sm:$0xff]
                  %2424 = vst [vmem:[%s2306 + $0x1d0] sm:$0xff] %v2423
                  %v2425 = vld [vmem:[%s2305 + $0x1d8] sm:$0xff]
                  %2426 = vst [vmem:[%s2306 + $0x1d8] sm:$0xff] %v2425
                  %v2427 = vld [vmem:[%s2305 + $0x1e0] sm:$0xff]
                  %2428 = vst [vmem:[%s2306 + $0x1e0] sm:$0xff] %v2427
                  %v2429 = vld [vmem:[%s2305 + $0x1e8] sm:$0xff]
                  %2430 = vst [vmem:[%s2306 + $0x1e8] sm:$0xff] %v2429
                  %v2431 = vld [vmem:[%s2305 + $0x1f0] sm:$0xff]
                  %2432 = vst [vmem:[%s2306 + $0x1f0] sm:$0xff] %v2431
                  %v2433 = vld [vmem:[%s2305 + $0x1f8] sm:$0xff]
                  %2434 = vst [vmem:[%s2306 + $0x1f8] sm:$0xff] %v2433
                  %s2435 = sadd.s32 1, %s2304
                  %p2436 = scmp.ge.s32.totalorder %s2435, %s2297
                  %s2437 = scalar_select %p2436, 0, %s2435
                  %s2438 = smul.u32 %s2437, 512
                  %s2439 = smul.u32 %s2437, 512
                  %s2440 = scalar_lea.vmem %s2104, %s2438 [#allocation5]
                  %s2441 = scalar_lea.vmem %s2115, %s2439
                $region75: #{tpu_custom_call.1} parent=69 // loop_footer
                  %s2301 = sadd.s32 %s2299, 1
                $region76: #{tpu_custom_call.1} parent=69 // loop_footer_branch
                  %2298 = sbr.rel target = $region72
                $region77: #{tpu_custom_call.1} parent=69 // loop_exit
                  _
                %s2442 = sshrl.u32 %s2111, 6
                %s2443 = sand.u32 %s2111, 63
                %s2444 = smul.u32 %s2442, 64
                %s2445 = smul.u32 8, %s2444
                %s2446 = scalar_lea.vmem %s2104, %s2445 [#allocation5]
                %s2447 = smul.u32 8, %s2444
                %s2448 = scalar_lea.vmem %s2115, %s2447
                // While loop
                $region78: #{tpu_custom_call.1} parent=69 // loop_pre_header
                  _
                $region79: #{tpu_custom_call.1} parent=69 // loop_header
                  %s2450 = sphi 0, %s2452
                  %p2451 = scmp.ge.s32.totalorder %s2450, %s2443
                  %s2455 = sphi 0, %s2462
                  %s2456 = sphi %s2446, %s2465
                  %s2457 = sphi %s2448, %s2466
                $region80: #{tpu_custom_call.1} parent=69 // loop_header_branch
                  %2454 = sbr.rel (%p2451) target = $region84
                $region81: #{tpu_custom_call.1} parent=69 // loop_body
                  %v2458 = vld [vmem:[%s2456] sm:$0xff]
                  %2459 = vst [vmem:[%s2457] sm:$0xff] %v2458
                  %s2460 = sadd.s32 1, %s2455
                  %p2461 = scmp.ge.s32.totalorder %s2460, %s2443
                  %s2462 = scalar_select %p2461, 0, %s2460
                  %s2463 = smul.u32 %s2462, 8
                  %s2464 = smul.u32 %s2462, 8
                  %s2465 = scalar_lea.vmem %s2446, %s2463 [#allocation5]
                  %s2466 = scalar_lea.vmem %s2448, %s2464
                $region82: #{tpu_custom_call.1} parent=69 // loop_footer
                  %s2452 = sadd.s32 %s2450, 1
                $region83: #{tpu_custom_call.1} parent=69 // loop_footer_branch
                  %2449 = sbr.rel target = $region79
                $region84: #{tpu_custom_call.1} parent=69 // loop_exit
                  _
              $region70: #{tpu_custom_call.1} parent=47 // pred_fallthru
                _
              // Predicated region
              $region85: #{tpu_custom_call.1} parent=47 // pred_check
                _
              $region86: #{tpu_custom_call.1} parent=47 // pred_check_branch
                %2468 = sbr.rel target = $region88
              $region87: #{tpu_custom_call.1} parent=47 // pred_region
                _
              $region88: #{tpu_custom_call.1} parent=47 // pred_fallthru
                _
            $region48: #{tpu_custom_call.1} parent=43 // pred_fallthru
              _
            // Predicated region
            $region49: #{tpu_custom_call.1} parent=43 // pred_check
              _
            $region50: #{tpu_custom_call.1} parent=43 // pred_check_branch
              %2122 = sbr.rel target = $region52
            $region51: #{tpu_custom_call.1} parent=43 // pred_region
              %s2124 = ssub.s32 256, 1
              %s2125 = sshrl.u32 %s2111, 6
              // While loop
              $region53: #{tpu_custom_call.1} parent=51 // loop_pre_header
                _
              $region54: #{tpu_custom_call.1} parent=51 // loop_header
                %s2127 = sphi 0, %s2129
                %p2128 = scmp.ge.s32.totalorder %s2127, %s2125
                %s2132 = sphi 0, %s2265
                %s2133 = sphi %s2104, %s2268
                %s2134 = sphi %s2115, %s2269
              $region55: #{tpu_custom_call.1} parent=51 // loop_header_branch
                %2131 = sbr.rel (%p2128) target = $region59
              $region56: #{tpu_custom_call.1} parent=51 // loop_body
                %v2135 = vld [vmem:[%s2133] sm:%s2124]
                %2136 = vst [vmem:[%s2134] sm:%s2124] %v2135
                %v2137 = vld [vmem:[%s2133 + $0x8] sm:%s2124]
                %2138 = vst [vmem:[%s2134 + $0x8] sm:%s2124] %v2137
                %v2139 = vld [vmem:[%s2133 + $0x10] sm:%s2124]
                %2140 = vst [vmem:[%s2134 + $0x10] sm:%s2124] %v2139
                %v2141 = vld [vmem:[%s2133 + $0x18] sm:%s2124]
                %2142 = vst [vmem:[%s2134 + $0x18] sm:%s2124] %v2141
                %v2143 = vld [vmem:[%s2133 + $0x20] sm:%s2124]
                %2144 = vst [vmem:[%s2134 + $0x20] sm:%s2124] %v2143
                %v2145 = vld [vmem:[%s2133 + $0x28] sm:%s2124]
                %2146 = vst [vmem:[%s2134 + $0x28] sm:%s2124] %v2145
                %v2147 = vld [vmem:[%s2133 + $0x30] sm:%s2124]
                %2148 = vst [vmem:[%s2134 + $0x30] sm:%s2124] %v2147
                %v2149 = vld [vmem:[%s2133 + $0x38] sm:%s2124]
                %2150 = vst [vmem:[%s2134 + $0x38] sm:%s2124] %v2149
                %v2151 = vld [vmem:[%s2133 + $0x40] sm:%s2124]
                %2152 = vst [vmem:[%s2134 + $0x40] sm:%s2124] %v2151
                %v2153 = vld [vmem:[%s2133 + $0x48] sm:%s2124]
                %2154 = vst [vmem:[%s2134 + $0x48] sm:%s2124] %v2153
                %v2155 = vld [vmem:[%s2133 + $0x50] sm:%s2124]
                %2156 = vst [vmem:[%s2134 + $0x50] sm:%s2124] %v2155
                %v2157 = vld [vmem:[%s2133 + $0x58] sm:%s2124]
                %2158 = vst [vmem:[%s2134 + $0x58] sm:%s2124] %v2157
                %v2159 = vld [vmem:[%s2133 + $0x60] sm:%s2124]
                %2160 = vst [vmem:[%s2134 + $0x60] sm:%s2124] %v2159
                %v2161 = vld [vmem:[%s2133 + $0x68] sm:%s2124]
                %2162 = vst [vmem:[%s2134 + $0x68] sm:%s2124] %v2161
                %v2163 = vld [vmem:[%s2133 + $0x70] sm:%s2124]
                %2164 = vst [vmem:[%s2134 + $0x70] sm:%s2124] %v2163
                %v2165 = vld [vmem:[%s2133 + $0x78] sm:%s2124]
                %2166 = vst [vmem:[%s2134 + $0x78] sm:%s2124] %v2165
                %v2167 = vld [vmem:[%s2133 + $0x80] sm:%s2124]
                %2168 = vst [vmem:[%s2134 + $0x80] sm:%s2124] %v2167
                %v2169 = vld [vmem:[%s2133 + $0x88] sm:%s2124]
                %2170 = vst [vmem:[%s2134 + $0x88] sm:%s2124] %v2169
                %v2171 = vld [vmem:[%s2133 + $0x90] sm:%s2124]
                %2172 = vst [vmem:[%s2134 + $0x90] sm:%s2124] %v2171
                %v2173 = vld [vmem:[%s2133 + $0x98] sm:%s2124]
                %2174 = vst [vmem:[%s2134 + $0x98] sm:%s2124] %v2173
                %v2175 = vld [vmem:[%s2133 + $0xa0] sm:%s2124]
                %2176 = vst [vmem:[%s2134 + $0xa0] sm:%s2124] %v2175
                %v2177 = vld [vmem:[%s2133 + $0xa8] sm:%s2124]
                %2178 = vst [vmem:[%s2134 + $0xa8] sm:%s2124] %v2177
                %v2179 = vld [vmem:[%s2133 + $0xb0] sm:%s2124]
                %2180 = vst [vmem:[%s2134 + $0xb0] sm:%s2124] %v2179
                %v2181 = vld [vmem:[%s2133 + $0xb8] sm:%s2124]
                %2182 = vst [vmem:[%s2134 + $0xb8] sm:%s2124] %v2181
                %v2183 = vld [vmem:[%s2133 + $0xc0] sm:%s2124]
                %2184 = vst [vmem:[%s2134 + $0xc0] sm:%s2124] %v2183
                %v2185 = vld [vmem:[%s2133 + $0xc8] sm:%s2124]
                %2186 = vst [vmem:[%s2134 + $0xc8] sm:%s2124] %v2185
                %v2187 = vld [vmem:[%s2133 + $0xd0] sm:%s2124]
                %2188 = vst [vmem:[%s2134 + $0xd0] sm:%s2124] %v2187
                %v2189 = vld [vmem:[%s2133 + $0xd8] sm:%s2124]
                %2190 = vst [vmem:[%s2134 + $0xd8] sm:%s2124] %v2189
                %v2191 = vld [vmem:[%s2133 + $0xe0] sm:%s2124]
                %2192 = vst [vmem:[%s2134 + $0xe0] sm:%s2124] %v2191
                %v2193 = vld [vmem:[%s2133 + $0xe8] sm:%s2124]
                %2194 = vst [vmem:[%s2134 + $0xe8] sm:%s2124] %v2193
                %v2195 = vld [vmem:[%s2133 + $0xf0] sm:%s2124]
                %2196 = vst [vmem:[%s2134 + $0xf0] sm:%s2124] %v2195
                %v2197 = vld [vmem:[%s2133 + $0xf8] sm:%s2124]
                %2198 = vst [vmem:[%s2134 + $0xf8] sm:%s2124] %v2197
                %v2199 = vld [vmem:[%s2133 + $0x100] sm:%s2124]
                %2200 = vst [vmem:[%s2134 + $0x100] sm:%s2124] %v2199
                %v2201 = vld [vmem:[%s2133 + $0x108] sm:%s2124]
                %2202 = vst [vmem:[%s2134 + $0x108] sm:%s2124] %v2201
                %v2203 = vld [vmem:[%s2133 + $0x110] sm:%s2124]
                %2204 = vst [vmem:[%s2134 + $0x110] sm:%s2124] %v2203
                %v2205 = vld [vmem:[%s2133 + $0x118] sm:%s2124]
                %2206 = vst [vmem:[%s2134 + $0x118] sm:%s2124] %v2205
                %v2207 = vld [vmem:[%s2133 + $0x120] sm:%s2124]
                %2208 = vst [vmem:[%s2134 + $0x120] sm:%s2124] %v2207
                %v2209 = vld [vmem:[%s2133 + $0x128] sm:%s2124]
                %2210 = vst [vmem:[%s2134 + $0x128] sm:%s2124] %v2209
                %v2211 = vld [vmem:[%s2133 + $0x130] sm:%s2124]
                %2212 = vst [vmem:[%s2134 + $0x130] sm:%s2124] %v2211
                %v2213 = vld [vmem:[%s2133 + $0x138] sm:%s2124]
                %2214 = vst [vmem:[%s2134 + $0x138] sm:%s2124] %v2213
                %v2215 = vld [vmem:[%s2133 + $0x140] sm:%s2124]
                %2216 = vst [vmem:[%s2134 + $0x140] sm:%s2124] %v2215
                %v2217 = vld [vmem:[%s2133 + $0x148] sm:%s2124]
                %2218 = vst [vmem:[%s2134 + $0x148] sm:%s2124] %v2217
                %v2219 = vld [vmem:[%s2133 + $0x150] sm:%s2124]
                %2220 = vst [vmem:[%s2134 + $0x150] sm:%s2124] %v2219
                %v2221 = vld [vmem:[%s2133 + $0x158] sm:%s2124]
                %2222 = vst [vmem:[%s2134 + $0x158] sm:%s2124] %v2221
                %v2223 = vld [vmem:[%s2133 + $0x160] sm:%s2124]
                %2224 = vst [vmem:[%s2134 + $0x160] sm:%s2124] %v2223
                %v2225 = vld [vmem:[%s2133 + $0x168] sm:%s2124]
                %2226 = vst [vmem:[%s2134 + $0x168] sm:%s2124] %v2225
                %v2227 = vld [vmem:[%s2133 + $0x170] sm:%s2124]
                %2228 = vst [vmem:[%s2134 + $0x170] sm:%s2124] %v2227
                %v2229 = vld [vmem:[%s2133 + $0x178] sm:%s2124]
                %2230 = vst [vmem:[%s2134 + $0x178] sm:%s2124] %v2229
                %v2231 = vld [vmem:[%s2133 + $0x180] sm:%s2124]
                %2232 = vst [vmem:[%s2134 + $0x180] sm:%s2124] %v2231
                %v2233 = vld [vmem:[%s2133 + $0x188] sm:%s2124]
                %2234 = vst [vmem:[%s2134 + $0x188] sm:%s2124] %v2233
                %v2235 = vld [vmem:[%s2133 + $0x190] sm:%s2124]
                %2236 = vst [vmem:[%s2134 + $0x190] sm:%s2124] %v2235
                %v2237 = vld [vmem:[%s2133 + $0x198] sm:%s2124]
                %2238 = vst [vmem:[%s2134 + $0x198] sm:%s2124] %v2237
                %v2239 = vld [vmem:[%s2133 + $0x1a0] sm:%s2124]
                %2240 = vst [vmem:[%s2134 + $0x1a0] sm:%s2124] %v2239
                %v2241 = vld [vmem:[%s2133 + $0x1a8] sm:%s2124]
                %2242 = vst [vmem:[%s2134 + $0x1a8] sm:%s2124] %v2241
                %v2243 = vld [vmem:[%s2133 + $0x1b0] sm:%s2124]
                %2244 = vst [vmem:[%s2134 + $0x1b0] sm:%s2124] %v2243
                %v2245 = vld [vmem:[%s2133 + $0x1b8] sm:%s2124]
                %2246 = vst [vmem:[%s2134 + $0x1b8] sm:%s2124] %v2245
                %v2247 = vld [vmem:[%s2133 + $0x1c0] sm:%s2124]
                %2248 = vst [vmem:[%s2134 + $0x1c0] sm:%s2124] %v2247
                %v2249 = vld [vmem:[%s2133 + $0x1c8] sm:%s2124]
                %2250 = vst [vmem:[%s2134 + $0x1c8] sm:%s2124] %v2249
                %v2251 = vld [vmem:[%s2133 + $0x1d0] sm:%s2124]
                %2252 = vst [vmem:[%s2134 + $0x1d0] sm:%s2124] %v2251
                %v2253 = vld [vmem:[%s2133 + $0x1d8] sm:%s2124]
                %2254 = vst [vmem:[%s2134 + $0x1d8] sm:%s2124] %v2253
                %v2255 = vld [vmem:[%s2133 + $0x1e0] sm:%s2124]
                %2256 = vst [vmem:[%s2134 + $0x1e0] sm:%s2124] %v2255
                %v2257 = vld [vmem:[%s2133 + $0x1e8] sm:%s2124]
                %2258 = vst [vmem:[%s2134 + $0x1e8] sm:%s2124] %v2257
                %v2259 = vld [vmem:[%s2133 + $0x1f0] sm:%s2124]
                %2260 = vst [vmem:[%s2134 + $0x1f0] sm:%s2124] %v2259
                %v2261 = vld [vmem:[%s2133 + $0x1f8] sm:%s2124]
                %2262 = vst [vmem:[%s2134 + $0x1f8] sm:%s2124] %v2261
                %s2263 = sadd.s32 1, %s2132
                %p2264 = scmp.ge.s32.totalorder %s2263, %s2125
                %s2265 = scalar_select %p2264, 0, %s2263
                %s2266 = smul.u32 %s2265, 512
                %s2267 = smul.u32 %s2265, 512
                %s2268 = scalar_lea.vmem %s2104, %s2266 [#allocation5]
                %s2269 = scalar_lea.vmem %s2115, %s2267
              $region57: #{tpu_custom_call.1} parent=51 // loop_footer
                %s2129 = sadd.s32 %s2127, 1
              $region58: #{tpu_custom_call.1} parent=51 // loop_footer_branch
                %2126 = sbr.rel target = $region54
              $region59: #{tpu_custom_call.1} parent=51 // loop_exit
                _
              %s2270 = sshrl.u32 %s2111, 6
              %s2271 = sand.u32 %s2111, 63
              %s2272 = smul.u32 %s2270, 64
              %s2273 = smul.u32 8, %s2272
              %s2274 = scalar_lea.vmem %s2104, %s2273 [#allocation5]
              %s2275 = smul.u32 8, %s2272
              %s2276 = scalar_lea.vmem %s2115, %s2275
              // While loop
              $region60: #{tpu_custom_call.1} parent=51 // loop_pre_header
                _
              $region61: #{tpu_custom_call.1} parent=51 // loop_header
                %s2278 = sphi 0, %s2280
                %p2279 = scmp.ge.s32.totalorder %s2278, %s2271
                %s2283 = sphi 0, %s2290
                %s2284 = sphi %s2274, %s2293
                %s2285 = sphi %s2276, %s2294
              $region62: #{tpu_custom_call.1} parent=51 // loop_header_branch
                %2282 = sbr.rel (%p2279) target = $region66
              $region63: #{tpu_custom_call.1} parent=51 // loop_body
                %v2286 = vld [vmem:[%s2284] sm:%s2124]
                %2287 = vst [vmem:[%s2285] sm:%s2124] %v2286
                %s2288 = sadd.s32 1, %s2283
                %p2289 = scmp.ge.s32.totalorder %s2288, %s2271
                %s2290 = scalar_select %p2289, 0, %s2288
                %s2291 = smul.u32 %s2290, 8
                %s2292 = smul.u32 %s2290, 8
                %s2293 = scalar_lea.vmem %s2274, %s2291 [#allocation5]
                %s2294 = scalar_lea.vmem %s2276, %s2292
              $region64: #{tpu_custom_call.1} parent=51 // loop_footer
                %s2280 = sadd.s32 %s2278, 1
              $region65: #{tpu_custom_call.1} parent=51 // loop_footer_branch
                %2277 = sbr.rel target = $region61
              $region66: #{tpu_custom_call.1} parent=51 // loop_exit
                _
            $region52: #{tpu_custom_call.1} parent=43 // pred_fallthru
              _
          $region44: #{tpu_custom_call.1} parent=39 // pred_fallthru
            _
          %2469 = vnop
        $region40: #{tpu_custom_call.1} parent=31 // pred_fallthru
          _
      $region32: #{tpu_custom_call.1} parent=5 // pred_fallthru
        _
      %p2470 = scmp.le.s32.totalorder 2, %s13
      // Predicated region
      $region89: #{tpu_custom_call.1} parent=5 // pred_check
        %p2471 = pneg %p2470
      $region90: #{tpu_custom_call.1} parent=5 // pred_check_branch
        %2473 = sbr.rel (%p2471) target = $region92
      $region91: #{tpu_custom_call.1} parent=5 // pred_region
        %s2474 = ssub.s32 %s13, 2
        // Predicated region
        $region93: #{tpu_custom_call.1} parent=91 // pred_check
          %p2475 = pneg %p110
        $region94: #{tpu_custom_call.1} parent=91 // pred_check_branch
          %2477 = sbr.rel (%p2475) target = $region96
        $region95: #{tpu_custom_call.1} parent=91 // pred_region
          %s2478 = sand.u32 %s95, 1
          %s2479 = sand.u32 %s95, 1
          %s2480 = smul.addr %s2479, 520
          %s2481 = scalar_lea.vmem [#allocation5], %s2480
        $region96: #{tpu_custom_call.1} parent=91 // pred_fallthru
          _
      $region92: #{tpu_custom_call.1} parent=5 // pred_fallthru
        _
    $region6: #{tpu_custom_call.1} parent=1 // loop_footer
      %s17 = sadd.s32 1, %s13
    $region7: #{tpu_custom_call.1} parent=1 // loop_footer_branch
      %12 = sbr.rel target = $region3
    $region8: #{tpu_custom_call.1} parent=1 // loop_exit
      _
    %2482 = vsyncpa [#allocation4], 1
    %s2483 = scalar_lea.sflag [#allocation4], 1
    %2484 = vsyncpa %s2483, 1

</llo_original>
